<compile_context>
chip_gen: v7x
topology: tpu7x:2x2x1
jax: 0.10.0
libtpu: 0.0.40
codegen_flags: <defaults>
</compile_context>

<pallas_src>
import functools

import jax
import jax.numpy as jnp
from jax.experimental import pallas as pl
from jax.experimental.pallas import tpu as pltpu

KERNEL_SIZE = 7
PAD = 3  # padding = 3 for kernel_size == 7 (as in the PyTorch module)


def _round_up(x, m):
    return (x + m - 1) // m * m


def _attention_map_kernel(w_ref, m_ref, o_ref, shift_ref, *, TH, W_out, K):
    """One grid step == one (batch tile, H tile).

    w_ref     : SMEM f32[2*K*K]                   flattened conv weight (in_ch, kh, kw)
    m_ref     : VMEM  [BT, 2, TH+2p, Wp]          pre-padded (avg, max) maps
    o_ref     : VMEM f32[BT, TH, W_out]           sigmoid(conv) attention map
    shift_ref : VMEM f32[2, K, BT, TH+2p, W_out]  dx lane-shifted planes (scratch)
    """
    # Write the K lane-shifted planes per channel once per block, reading the
    # channels straight off the input ref (no whole-block value load).
    for c in range(2):
        for dx in range(K):
            shift_ref[c, dx, :, :, :] = (
                m_ref[:, c, :, dx:dx + W_out].astype(jnp.float32))

    # 7x7 cross-correlation, 2 in-channels (avg, max), 1 out-channel, no bias
    # -- identical math to SubMConv2d restricted to active sites.  Every tap
    # reads a window by slicing the scratch *ref* at a sublane offset (plain
    # address-offset vld), so the VALU FMA chain is the only binding unit.
    acc = jnp.zeros(o_ref.shape, jnp.float32)
    for dy in range(K):
        for dx in range(K):
            wa = w_ref[0 * K * K + dy * K + dx]
            wm = w_ref[1 * K * K + dy * K + dx]
            acc = acc + wa * shift_ref[0, dx, :, dy:dy + TH, :] \
                      + wm * shift_ref[1, dx, :, dy:dy + TH, :]

    # Sigmoid epilogue.  approx=True would push the reciprocal to the idle EUP
    # (~2-3%) but misses the 1e-5 check, so keep the exact reciprocal.
    o_ref[...] = pl.reciprocal(1.0 + jnp.exp(-acc), approx=False)


def _vmem_plan():
    """Return (tile-sizing budget, scoped-VMEM limit to request) per generation."""
    try:
        cap = int(pltpu.get_tpu_info().vmem_capacity_bytes)
    except Exception:
        return 12 << 20, None           # conservative: fits every generation's default
    if cap <= (64 << 20):               # v7x-class: 64 MiB VMEM per TensorCore
        return 20 << 20, 28 << 20
    return 40 << 20, 48 << 20           # v5e / v6e: 128 MiB physical VMEM


def sparse_spatial_attention_2d(features, indices, weight, spatial_shape,
                                batch_size, *, batch_tile=None, h_tile=None,
                                maps_dtype=jnp.float32):
    """features: f32[N, C]; indices: i32[N, 3] = (batch, y, x); weight: f32[2, K, K]."""
    H, W = spatial_shape
    N, C = features.shape
    K = weight.shape[-1]
    pad = K // 2

    # Lane padding: output width and padded-map width are multiples of 128.
    W_out = _round_up(W, 128)
    Wp = _round_up(W_out + 2 * pad, 128)
    Hp = H + 2 * pad

    feats = features.astype(jnp.float32)
    b, y, x = indices[:, 0], indices[:, 1], indices[:, 2]

    # Channel reductions on the sparse [N, C] list (lane-dense, wrapper side).
    avg = jnp.mean(feats, axis=1)       # [N]
    mx = jnp.max(feats, axis=1)         # [N]

    # Scatter ONLY the 2-channel (avg, max) map into a pre-padded dense grid
    # (zeros at inactive sites, in the halo, and in the lane pad columns).
    # NOTE: assumes unique (b, y, x) indices (standard spconv invariant).
    # TODO(synk): fuse this scatter into the kernel via scalar-prefetched
    # (y, x) lists to drop one HBM round trip of the maps.
    maps = jnp.zeros((batch_size, 2, Hp, Wp), maps_dtype)
    maps = maps.at[b, 0, y + pad, x + pad].set(avg.astype(maps_dtype))
    maps = maps.at[b, 1, y + pad, x + pad].set(mx.astype(maps_dtype))

    in_bytes = jnp.dtype(maps_dtype).itemsize
    budget, vmem_limit = _vmem_plan()

    def tile_bytes(bt, th):
        thp = th + 2 * pad
        return (bt * 2 * thp * Wp * in_bytes * 2        # input block, double-buffered
                + bt * th * W_out * 4 * 2               # output block, double-buffered
                + 2 * K * bt * thp * W_out * 4          # shifted-plane VMEM scratch
                + 2 * bt * th * W_out * 4)              # accumulator value headroom

    # H tile: largest divisor of H (multiple of 8, or H itself) fitting budget.
    h_cands = [d for d in range(H, 0, -1)
               if H % d == 0 and (d % 8 == 0 or d == H)]
    if h_tile is None:
        h_tile = next((d for d in h_cands if tile_bytes(1, d) <= budget),
                      h_cands[-1])
    assert H % h_tile == 0 and (h_tile % 8 == 0 or h_tile == H)

    # Batch tile: largest divisor of batch_size that fits next to the H tile.
    b_cands = [d for d in range(batch_size, 0, -1) if batch_size % d == 0]
    if batch_tile is None:
        batch_tile = next((d for d in b_cands if tile_bytes(d, h_tile) <= budget), 1)
        # Keep >= 2 total grid steps when possible so both TensorCores get work.
        if (batch_size // batch_tile) * (H // h_tile) < 2:
            if batch_size >= 2:
                batch_tile = next(d for d in b_cands if d <= batch_size // 2)
            elif len(h_cands) > 1:
                h_tile = h_cands[1]
    assert batch_size % batch_tile == 0

    n_ht = H // h_tile
    thp = h_tile + 2 * pad

    # Replicate the 2*pad halo rows per H tile on the wrapper side so the
    # kernel BlockSpec stays plain, non-overlapping Blocked indexing.
    row_idx = jnp.arange(n_ht)[:, None] * h_tile + jnp.arange(thp)[None, :]
    maps_t = maps[:, :, row_idx, :]                       # [B, 2, n_ht, thp, Wp]

    w_flat = weight.astype(jnp.float32).reshape(-1)       # [2*K*K] -> SMEM

    kernel = functools.partial(_attention_map_kernel, TH=h_tile, W_out=W_out, K=K)

    attn = pl.pallas_call(
        kernel,
        out_shape=jax.ShapeDtypeStruct((batch_size, H, W_out), jnp.float32),
        grid_spec=pltpu.PrefetchScalarGridSpec(
            num_scalar_prefetch=1,                        # conv weights -> SMEM
            grid=(batch_size // batch_tile, n_ht),
            in_specs=[
                pl.BlockSpec((batch_tile, 2, None, thp, Wp),
                             lambda i, t, w: (i, 0, t, 0, 0)),
            ],
            out_specs=pl.BlockSpec((batch_tile, h_tile, W_out),
                                   lambda i, t, w: (i, t, 0)),
            scratch_shapes=[
                pltpu.VMEM((2, K, batch_tile, thp, W_out), jnp.float32),
            ],
        ),
        compiler_params=pltpu.CompilerParams(
            dimension_semantics=("parallel", "parallel"),
            vmem_limit_bytes=vmem_limit,
        ),
    )(w_flat, maps_t)                                     # [B, H, W_out]

    # Sparse gating in the wrapper: gather attention at active sites only
    # (x < W, so the lane-pad columns are never read), matching
    # replace_feature(input, sigmoid(conv) * input.features).
    return features * attn[b, y, x][:, None]


def _reference(features, indices, weight, spatial_shape, batch_size):
    """Pure-JAX dense-equivalent reference for verification."""
    H, W = spatial_shape
    pad = weight.shape[-1] // 2
    b, y, x = indices[:, 0], indices[:, 1], indices[:, 2]
    dense = jnp.zeros((batch_size, H, W, features.shape[1]), jnp.float32).at[b, y, x].set(
        features.astype(jnp.float32))
    avg = jnp.mean(dense, axis=-1)
    mx = jnp.max(dense, axis=-1)
    m2 = jnp.stack([avg, mx], axis=1)                     # NCHW, 2 channels
    w = weight[None].astype(jnp.float32)                  # OIHW, O=1, I=2
    conv = jax.lax.conv_general_dilated(
        m2, w, window_strides=(1, 1), padding=[(pad, pad), (pad, pad)],
        dimension_numbers=("NCHW", "OIHW", "NCHW"),
        precision=jax.lax.Precision.HIGHEST)[:, 0]        # [B, H, W]
    attn = jax.nn.sigmoid(conv)
    return (dense * attn[..., None])[b, y, x]


if __name__ == "__main__":
    key = jax.random.PRNGKey(0)
    B, C, H, W = 2, 4, 16, 16
    N_PER_BATCH = 48
    k_feat, k_w, k_perm = jax.random.split(key, 3)

    # Deterministic sparse indices: distinct active spatial sites per batch elem.
    idx_list = []
    for bi in range(B):
        perm = jax.random.permutation(jax.random.fold_in(k_perm, bi), H * W)[:N_PER_BATCH]
        ys = (perm // W).astype(jnp.int32)
        xs = (perm % W).astype(jnp.int32)
        bs = jnp.full((N_PER_BATCH,), bi, jnp.int32)
        idx_list.append(jnp.stack([bs, ys, xs], axis=1))
    indices = jnp.concatenate(idx_list, axis=0)           # [N, 3] = (b, y, x)
    N = indices.shape[0]

    features = jax.random.normal(k_feat, (N, C), jnp.float32)

    # SubMConv2d(2, 1, 7, padding=3, bias=False) weight: (in=2, kh=7, kw=7), out=1.
    weight = jax.random.normal(k_w, (2, KERNEL_SIZE, KERNEL_SIZE), jnp.float32) * 0.1

    # Explicit small tiles to exercise both grid axes (batch tiling + halo'd H tiling).
    out = sparse_spatial_attention_2d(features, indices, weight, (H, W), B,
                                      batch_tile=1, h_tile=8)
    out = jax.block_until_ready(out)
    assert out.shape == (N, C)

    ref = _reference(features, indices, weight, (H, W), B)
    assert jnp.allclose(out, ref, atol=1e-5, rtol=1e-5), float(jnp.max(jnp.abs(out - ref)))

    print("KERNEL_OK")
</pallas_src>

<mosaic_0001>
module attributes {stable_mosaic.version = 11 : i64} {
  func.func @_attention_map_kernel(%arg0: i32, %arg1: i32, %arg2: memref<98xf32, #tpu.memory_space<smem>>, %arg3: memref<1x2x1x14x256xf32, #tpu.memory_space<vmem>>, %arg4: memref<1x8x128xf32, #tpu.memory_space<vmem>>, %arg5: memref<2x7x1x14x128xf32, #tpu.memory_space<vmem>>) attributes {dimension_semantics = [#tpu.dimension_semantics<parallel>, #tpu.dimension_semantics<parallel>], iteration_bounds = array<i64: 2, 2>, scalar_prefetch = 1 : i64, scratch_operands = 1 : i64, tpu.core_type = #tpu.core_type<tc>, window_params = [{transform_indices = @transform_0, window_bounds = array<i64: 1, 2, 1, 14, 256>}, {transform_indices = @transform_1, window_bounds = array<i64: 1, 8, 128>}]} {
    %c0 = arith.constant 0 : index
    %c0_0 = arith.constant 0 : index
    %c0_1 = arith.constant 0 : index
    %c0_2 = arith.constant 0 : index
    %c0_3 = arith.constant 0 : index
    %0 = vector.load %arg3[%c0, %c0_0, %c0_1, %c0_2, %c0_3] : memref<1x2x1x14x256xf32, #tpu.memory_space<vmem>>, vector<1x1x1x14x128xf32>
    %1 = vector.shape_cast %0 : vector<1x1x1x14x128xf32> to vector<1x14x128xf32>
    %c0_4 = arith.constant 0 : index
    %c0_5 = arith.constant 0 : index
    %c0_6 = arith.constant 0 : index
    %c0_7 = arith.constant 0 : index
    %c0_8 = arith.constant 0 : index
    %2 = vector.load %arg5[%c0_4, %c0_5, %c0_6, %c0_7, %c0_8] : memref<2x7x1x14x128xf32, #tpu.memory_space<vmem>>, vector<1x1x1x14x128xf32>
    %3 = vector.shape_cast %2 : vector<1x1x1x14x128xf32> to vector<1x14x128xf32>
    %4 = vector.shape_cast %1 : vector<1x14x128xf32> to vector<1x1x1x14x128xf32>
    tpu.vector_store %arg5[%c0_4, %c0_5, %c0_6, %c0_7, %c0_8], %4 {strides = array<i32>} : memref<2x7x1x14x128xf32, #tpu.memory_space<vmem>>, vector<1x1x1x14x128xf32>,
    %c0_9 = arith.constant 0 : index
    %c0_10 = arith.constant 0 : index
    %c0_11 = arith.constant 0 : index
    %c0_12 = arith.constant 0 : index
    %c1 = arith.constant 1 : index
    %5 = vector.load %arg3[%c0_9, %c0_10, %c0_11, %c0_12, %c1] : memref<1x2x1x14x256xf32, #tpu.memory_space<vmem>>, vector<1x1x1x14x128xf32>
    %6 = vector.shape_cast %5 : vector<1x1x1x14x128xf32> to vector<1x14x128xf32>
    %c0_13 = arith.constant 0 : index
    %c1_14 = arith.constant 1 : index
    %c0_15 = arith.constant 0 : index
    %c0_16 = arith.constant 0 : index
    %c0_17 = arith.constant 0 : index
    %7 = vector.load %arg5[%c0_13, %c1_14, %c0_15, %c0_16, %c0_17] : memref<2x7x1x14x128xf32, #tpu.memory_space<vmem>>, vector<1x1x1x14x128xf32>
    %8 = vector.shape_cast %7 : vector<1x1x1x14x128xf32> to vector<1x14x128xf32>
    %9 = vector.shape_cast %6 : vector<1x14x128xf32> to vector<1x1x1x14x128xf32>
    tpu.vector_store %arg5[%c0_13, %c1_14, %c0_15, %c0_16, %c0_17], %9 {strides = array<i32>} : memref<2x7x1x14x128xf32, #tpu.memory_space<vmem>>, vector<1x1x1x14x128xf32>,
    %c0_18 = arith.constant 0 : index
    %c0_19 = arith.constant 0 : index
    %c0_20 = arith.constant 0 : index
    %c0_21 = arith.constant 0 : index
    %c2 = arith.constant 2 : index
    %10 = vector.load %arg3[%c0_18, %c0_19, %c0_20, %c0_21, %c2] : memref<1x2x1x14x256xf32, #tpu.memory_space<vmem>>, vector<1x1x1x14x128xf32>
    %11 = vector.shape_cast %10 : vector<1x1x1x14x128xf32> to vector<1x14x128xf32>
    %c0_22 = arith.constant 0 : index
    %c2_23 = arith.constant 2 : index
    %c0_24 = arith.constant 0 : index
    %c0_25 = arith.constant 0 : index
    %c0_26 = arith.constant 0 : index
    %12 = vector.load %arg5[%c0_22, %c2_23, %c0_24, %c0_25, %c0_26] : memref<2x7x1x14x128xf32, #tpu.memory_space<vmem>>, vector<1x1x1x14x128xf32>
    %13 = vector.shape_cast %12 : vector<1x1x1x14x128xf32> to vector<1x14x128xf32>
    %14 = vector.shape_cast %11 : vector<1x14x128xf32> to vector<1x1x1x14x128xf32>
    tpu.vector_store %arg5[%c0_22, %c2_23, %c0_24, %c0_25, %c0_26], %14 {strides = array<i32>} : memref<2x7x1x14x128xf32, #tpu.memory_space<vmem>>, vector<1x1x1x14x128xf32>,
    %c0_27 = arith.constant 0 : index
    %c0_28 = arith.constant 0 : index
    %c0_29 = arith.constant 0 : index
    %c0_30 = arith.constant 0 : index
    %c3 = arith.constant 3 : index
    %15 = vector.load %arg3[%c0_27, %c0_28, %c0_29, %c0_30, %c3] : memref<1x2x1x14x256xf32, #tpu.memory_space<vmem>>, vector<1x1x1x14x128xf32>
    %16 = vector.shape_cast %15 : vector<1x1x1x14x128xf32> to vector<1x14x128xf32>
    %c0_31 = arith.constant 0 : index
    %c3_32 = arith.constant 3 : index
    %c0_33 = arith.constant 0 : index
    %c0_34 = arith.constant 0 : index
    %c0_35 = arith.constant 0 : index
    %17 = vector.load %arg5[%c0_31, %c3_32, %c0_33, %c0_34, %c0_35] : memref<2x7x1x14x128xf32, #tpu.memory_space<vmem>>, vector<1x1x1x14x128xf32>
    %18 = vector.shape_cast %17 : vector<1x1x1x14x128xf32> to vector<1x14x128xf32>
    %19 = vector.shape_cast %16 : vector<1x14x128xf32> to vector<1x1x1x14x128xf32>
    tpu.vector_store %arg5[%c0_31, %c3_32, %c0_33, %c0_34, %c0_35], %19 {strides = array<i32>} : memref<2x7x1x14x128xf32, #tpu.memory_space<vmem>>, vector<1x1x1x14x128xf32>,
    %c0_36 = arith.constant 0 : index
    %c0_37 = arith.constant 0 : index
    %c0_38 = arith.constant 0 : index
    %c0_39 = arith.constant 0 : index
    %c4 = arith.constant 4 : index
    %20 = vector.load %arg3[%c0_36, %c0_37, %c0_38, %c0_39, %c4] : memref<1x2x1x14x256xf32, #tpu.memory_space<vmem>>, vector<1x1x1x14x128xf32>
    %21 = vector.shape_cast %20 : vector<1x1x1x14x128xf32> to vector<1x14x128xf32>
    %c0_40 = arith.constant 0 : index
    %c4_41 = arith.constant 4 : index
    %c0_42 = arith.constant 0 : index
    %c0_43 = arith.constant 0 : index
    %c0_44 = arith.constant 0 : index
    %22 = vector.load %arg5[%c0_40, %c4_41, %c0_42, %c0_43, %c0_44] : memref<2x7x1x14x128xf32, #tpu.memory_space<vmem>>, vector<1x1x1x14x128xf32>
    %23 = vector.shape_cast %22 : vector<1x1x1x14x128xf32> to vector<1x14x128xf32>
    %24 = vector.shape_cast %21 : vector<1x14x128xf32> to vector<1x1x1x14x128xf32>
    tpu.vector_store %arg5[%c0_40, %c4_41, %c0_42, %c0_43, %c0_44], %24 {strides = array<i32>} : memref<2x7x1x14x128xf32, #tpu.memory_space<vmem>>, vector<1x1x1x14x128xf32>,
    %c0_45 = arith.constant 0 : index
    %c0_46 = arith.constant 0 : index
    %c0_47 = arith.constant 0 : index
    %c0_48 = arith.constant 0 : index
    %c5 = arith.constant 5 : index
    %25 = vector.load %arg3[%c0_45, %c0_46, %c0_47, %c0_48, %c5] : memref<1x2x1x14x256xf32, #tpu.memory_space<vmem>>, vector<1x1x1x14x128xf32>
    %26 = vector.shape_cast %25 : vector<1x1x1x14x128xf32> to vector<1x14x128xf32>
    %c0_49 = arith.constant 0 : index
    %c5_50 = arith.constant 5 : index
    %c0_51 = arith.constant 0 : index
    %c0_52 = arith.constant 0 : index
    %c0_53 = arith.constant 0 : index
    %27 = vector.load %arg5[%c0_49, %c5_50, %c0_51, %c0_52, %c0_53] : memref<2x7x1x14x128xf32, #tpu.memory_space<vmem>>, vector<1x1x1x14x128xf32>
    %28 = vector.shape_cast %27 : vector<1x1x1x14x128xf32> to vector<1x14x128xf32>
    %29 = vector.shape_cast %26 : vector<1x14x128xf32> to vector<1x1x1x14x128xf32>
    tpu.vector_store %arg5[%c0_49, %c5_50, %c0_51, %c0_52, %c0_53], %29 {strides = array<i32>} : memref<2x7x1x14x128xf32, #tpu.memory_space<vmem>>, vector<1x1x1x14x128xf32>,
    %c0_54 = arith.constant 0 : index
    %c0_55 = arith.constant 0 : index
    %c0_56 = arith.constant 0 : index
    %c0_57 = arith.constant 0 : index
    %c6 = arith.constant 6 : index
    %30 = vector.load %arg3[%c0_54, %c0_55, %c0_56, %c0_57, %c6] : memref<1x2x1x14x256xf32, #tpu.memory_space<vmem>>, vector<1x1x1x14x128xf32>
    %31 = vector.shape_cast %30 : vector<1x1x1x14x128xf32> to vector<1x14x128xf32>
    %c0_58 = arith.constant 0 : index
    %c6_59 = arith.constant 6 : index
    %c0_60 = arith.constant 0 : index
    %c0_61 = arith.constant 0 : index
    %c0_62 = arith.constant 0 : index
    %32 = vector.load %arg5[%c0_58, %c6_59, %c0_60, %c0_61, %c0_62] : memref<2x7x1x14x128xf32, #tpu.memory_space<vmem>>, vector<1x1x1x14x128xf32>
    %33 = vector.shape_cast %32 : vector<1x1x1x14x128xf32> to vector<1x14x128xf32>
    %34 = vector.shape_cast %31 : vector<1x14x128xf32> to vector<1x1x1x14x128xf32>
    tpu.vector_store %arg5[%c0_58, %c6_59, %c0_60, %c0_61, %c0_62], %34 {strides = array<i32>} : memref<2x7x1x14x128xf32, #tpu.memory_space<vmem>>, vector<1x1x1x14x128xf32>,
    %c0_63 = arith.constant 0 : index
    %c1_64 = arith.constant 1 : index
    %c0_65 = arith.constant 0 : index
    %c0_66 = arith.constant 0 : index
    %c0_67 = arith.constant 0 : index
    %35 = vector.load %arg3[%c0_63, %c1_64, %c0_65, %c0_66, %c0_67] : memref<1x2x1x14x256xf32, #tpu.memory_space<vmem>>, vector<1x1x1x14x128xf32>
    %36 = vector.shape_cast %35 : vector<1x1x1x14x128xf32> to vector<1x14x128xf32>
    %c1_68 = arith.constant 1 : index
    %c0_69 = arith.constant 0 : index
    %c0_70 = arith.constant 0 : index
    %c0_71 = arith.constant 0 : index
    %c0_72 = arith.constant 0 : index
    %37 = vector.load %arg5[%c1_68, %c0_69, %c0_70, %c0_71, %c0_72] : memref<2x7x1x14x128xf32, #tpu.memory_space<vmem>>, vector<1x1x1x14x128xf32>
    %38 = vector.shape_cast %37 : vector<1x1x1x14x128xf32> to vector<1x14x128xf32>
    %39 = vector.shape_cast %36 : vector<1x14x128xf32> to vector<1x1x1x14x128xf32>
    tpu.vector_store %arg5[%c1_68, %c0_69, %c0_70, %c0_71, %c0_72], %39 {strides = array<i32>} : memref<2x7x1x14x128xf32, #tpu.memory_space<vmem>>, vector<1x1x1x14x128xf32>,
    %c0_73 = arith.constant 0 : index
    %c1_74 = arith.constant 1 : index
    %c0_75 = arith.constant 0 : index
    %c0_76 = arith.constant 0 : index
    %c1_77 = arith.constant 1 : index
    %40 = vector.load %arg3[%c0_73, %c1_74, %c0_75, %c0_76, %c1_77] : memref<1x2x1x14x256xf32, #tpu.memory_space<vmem>>, vector<1x1x1x14x128xf32>
    %41 = vector.shape_cast %40 : vector<1x1x1x14x128xf32> to vector<1x14x128xf32>
    %c1_78 = arith.constant 1 : index
    %c1_79 = arith.constant 1 : index
    %c0_80 = arith.constant 0 : index
    %c0_81 = arith.constant 0 : index
    %c0_82 = arith.constant 0 : index
    %42 = vector.load %arg5[%c1_78, %c1_79, %c0_80, %c0_81, %c0_82] : memref<2x7x1x14x128xf32, #tpu.memory_space<vmem>>, vector<1x1x1x14x128xf32>
    %43 = vector.shape_cast %42 : vector<1x1x1x14x128xf32> to vector<1x14x128xf32>
    %44 = vector.shape_cast %41 : vector<1x14x128xf32> to vector<1x1x1x14x128xf32>
    tpu.vector_store %arg5[%c1_78, %c1_79, %c0_80, %c0_81, %c0_82], %44 {strides = array<i32>} : memref<2x7x1x14x128xf32, #tpu.memory_space<vmem>>, vector<1x1x1x14x128xf32>,
    %c0_83 = arith.constant 0 : index
    %c1_84 = arith.constant 1 : index
    %c0_85 = arith.constant 0 : index
    %c0_86 = arith.constant 0 : index
    %c2_87 = arith.constant 2 : index
    %45 = vector.load %arg3[%c0_83, %c1_84, %c0_85, %c0_86, %c2_87] : memref<1x2x1x14x256xf32, #tpu.memory_space<vmem>>, vector<1x1x1x14x128xf32>
    %46 = vector.shape_cast %45 : vector<1x1x1x14x128xf32> to vector<1x14x128xf32>
    %c1_88 = arith.constant 1 : index
    %c2_89 = arith.constant 2 : index
    %c0_90 = arith.constant 0 : index
    %c0_91 = arith.constant 0 : index
    %c0_92 = arith.constant 0 : index
    %47 = vector.load %arg5[%c1_88, %c2_89, %c0_90, %c0_91, %c0_92] : memref<2x7x1x14x128xf32, #tpu.memory_space<vmem>>, vector<1x1x1x14x128xf32>
    %48 = vector.shape_cast %47 : vector<1x1x1x14x128xf32> to vector<1x14x128xf32>
    %49 = vector.shape_cast %46 : vector<1x14x128xf32> to vector<1x1x1x14x128xf32>
    tpu.vector_store %arg5[%c1_88, %c2_89, %c0_90, %c0_91, %c0_92], %49 {strides = array<i32>} : memref<2x7x1x14x128xf32, #tpu.memory_space<vmem>>, vector<1x1x1x14x128xf32>,
    %c0_93 = arith.constant 0 : index
    %c1_94 = arith.constant 1 : index
    %c0_95 = arith.constant 0 : index
    %c0_96 = arith.constant 0 : index
    %c3_97 = arith.constant 3 : index
    %50 = vector.load %arg3[%c0_93, %c1_94, %c0_95, %c0_96, %c3_97] : memref<1x2x1x14x256xf32, #tpu.memory_space<vmem>>, vector<1x1x1x14x128xf32>
    %51 = vector.shape_cast %50 : vector<1x1x1x14x128xf32> to vector<1x14x128xf32>
    %c1_98 = arith.constant 1 : index
    %c3_99 = arith.constant 3 : index
    %c0_100 = arith.constant 0 : index
    %c0_101 = arith.constant 0 : index
    %c0_102 = arith.constant 0 : index
    %52 = vector.load %arg5[%c1_98, %c3_99, %c0_100, %c0_101, %c0_102] : memref<2x7x1x14x128xf32, #tpu.memory_space<vmem>>, vector<1x1x1x14x128xf32>
    %53 = vector.shape_cast %52 : vector<1x1x1x14x128xf32> to vector<1x14x128xf32>
    %54 = vector.shape_cast %51 : vector<1x14x128xf32> to vector<1x1x1x14x128xf32>
    tpu.vector_store %arg5[%c1_98, %c3_99, %c0_100, %c0_101, %c0_102], %54 {strides = array<i32>} : memref<2x7x1x14x128xf32, #tpu.memory_space<vmem>>, vector<1x1x1x14x128xf32>,
    %c0_103 = arith.constant 0 : index
    %c1_104 = arith.constant 1 : index
    %c0_105 = arith.constant 0 : index
    %c0_106 = arith.constant 0 : index
    %c4_107 = arith.constant 4 : index
    %55 = vector.load %arg3[%c0_103, %c1_104, %c0_105, %c0_106, %c4_107] : memref<1x2x1x14x256xf32, #tpu.memory_space<vmem>>, vector<1x1x1x14x128xf32>
    %56 = vector.shape_cast %55 : vector<1x1x1x14x128xf32> to vector<1x14x128xf32>
    %c1_108 = arith.constant 1 : index
    %c4_109 = arith.constant 4 : index
    %c0_110 = arith.constant 0 : index
    %c0_111 = arith.constant 0 : index
    %c0_112 = arith.constant 0 : index
    %57 = vector.load %arg5[%c1_108, %c4_109, %c0_110, %c0_111, %c0_112] : memref<2x7x1x14x128xf32, #tpu.memory_space<vmem>>, vector<1x1x1x14x128xf32>
    %58 = vector.shape_cast %57 : vector<1x1x1x14x128xf32> to vector<1x14x128xf32>
    %59 = vector.shape_cast %56 : vector<1x14x128xf32> to vector<1x1x1x14x128xf32>
    tpu.vector_store %arg5[%c1_108, %c4_109, %c0_110, %c0_111, %c0_112], %59 {strides = array<i32>} : memref<2x7x1x14x128xf32, #tpu.memory_space<vmem>>, vector<1x1x1x14x128xf32>,
    %c0_113 = arith.constant 0 : index
    %c1_114 = arith.constant 1 : index
    %c0_115 = arith.constant 0 : index
    %c0_116 = arith.constant 0 : index
    %c5_117 = arith.constant 5 : index
    %60 = vector.load %arg3[%c0_113, %c1_114, %c0_115, %c0_116, %c5_117] : memref<1x2x1x14x256xf32, #tpu.memory_space<vmem>>, vector<1x1x1x14x128xf32>
    %61 = vector.shape_cast %60 : vector<1x1x1x14x128xf32> to vector<1x14x128xf32>
    %c1_118 = arith.constant 1 : index
    %c5_119 = arith.constant 5 : index
    %c0_120 = arith.constant 0 : index
    %c0_121 = arith.constant 0 : index
    %c0_122 = arith.constant 0 : index
    %62 = vector.load %arg5[%c1_118, %c5_119, %c0_120, %c0_121, %c0_122] : memref<2x7x1x14x128xf32, #tpu.memory_space<vmem>>, vector<1x1x1x14x128xf32>
    %63 = vector.shape_cast %62 : vector<1x1x1x14x128xf32> to vector<1x14x128xf32>
    %64 = vector.shape_cast %61 : vector<1x14x128xf32> to vector<1x1x1x14x128xf32>
    tpu.vector_store %arg5[%c1_118, %c5_119, %c0_120, %c0_121, %c0_122], %64 {strides = array<i32>} : memref<2x7x1x14x128xf32, #tpu.memory_space<vmem>>, vector<1x1x1x14x128xf32>,
    %c0_123 = arith.constant 0 : index
    %c1_124 = arith.constant 1 : index
    %c0_125 = arith.constant 0 : index
    %c0_126 = arith.constant 0 : index
    %c6_127 = arith.constant 6 : index
    %65 = vector.load %arg3[%c0_123, %c1_124, %c0_125, %c0_126, %c6_127] : memref<1x2x1x14x256xf32, #tpu.memory_space<vmem>>, vector<1x1x1x14x128xf32>
    %66 = vector.shape_cast %65 : vector<1x1x1x14x128xf32> to vector<1x14x128xf32>
    %c1_128 = arith.constant 1 : index
    %c6_129 = arith.constant 6 : index
    %c0_130 = arith.constant 0 : index
    %c0_131 = arith.constant 0 : index
    %c0_132 = arith.constant 0 : index
    %67 = vector.load %arg5[%c1_128, %c6_129, %c0_130, %c0_131, %c0_132] : memref<2x7x1x14x128xf32, #tpu.memory_space<vmem>>, vector<1x1x1x14x128xf32>
    %68 = vector.shape_cast %67 : vector<1x1x1x14x128xf32> to vector<1x14x128xf32>
    %69 = vector.shape_cast %66 : vector<1x14x128xf32> to vector<1x1x1x14x128xf32>
    tpu.vector_store %arg5[%c1_128, %c6_129, %c0_130, %c0_131, %c0_132], %69 {strides = array<i32>} : memref<2x7x1x14x128xf32, #tpu.memory_space<vmem>>, vector<1x1x1x14x128xf32>,
    %cst = arith.constant 0.000000e+00 : f32
    %70 = vector.broadcast %cst : f32 to vector<1x8x128xf32>
    %c0_133 = arith.constant 0 : index
    %71 = memref.load %arg2[%c0_133] : memref<98xf32, #tpu.memory_space<smem>>
    %c49 = arith.constant 49 : index
    %72 = memref.load %arg2[%c49] : memref<98xf32, #tpu.memory_space<smem>>
    %c0_134 = arith.constant 0 : index
    %c0_135 = arith.constant 0 : index
    %c0_136 = arith.constant 0 : index
    %c0_137 = arith.constant 0 : index
    %c0_138 = arith.constant 0 : index
    %73 = vector.load %arg5[%c0_134, %c0_135, %c0_136, %c0_137, %c0_138] : memref<2x7x1x14x128xf32, #tpu.memory_space<vmem>>, vector<1x1x1x8x128xf32>
    %74 = vector.shape_cast %73 : vector<1x1x1x8x128xf32> to vector<1x8x128xf32>
    %75 = vector.broadcast %71 : f32 to vector<1x8x128xf32>
    %76 = arith.mulf %75, %74 : vector<1x8x128xf32>
    %77 = arith.addf %70, %76 : vector<1x8x128xf32>
    %c1_139 = arith.constant 1 : index
    %c0_140 = arith.constant 0 : index
    %c0_141 = arith.constant 0 : index
    %c0_142 = arith.constant 0 : index
    %c0_143 = arith.constant 0 : index
    %78 = vector.load %arg5[%c1_139, %c0_140, %c0_141, %c0_142, %c0_143] : memref<2x7x1x14x128xf32, #tpu.memory_space<vmem>>, vector<1x1x1x8x128xf32>
    %79 = vector.shape_cast %78 : vector<1x1x1x8x128xf32> to vector<1x8x128xf32>
    %80 = vector.broadcast %72 : f32 to vector<1x8x128xf32>
    %81 = arith.mulf %80, %79 : vector<1x8x128xf32>
    %82 = arith.addf %77, %81 : vector<1x8x128xf32>
    %c1_144 = arith.constant 1 : index
    %83 = memref.load %arg2[%c1_144] : memref<98xf32, #tpu.memory_space<smem>>
    %c50 = arith.constant 50 : index
    %84 = memref.load %arg2[%c50] : memref<98xf32, #tpu.memory_space<smem>>
    %c0_145 = arith.constant 0 : index
    %c1_146 = arith.constant 1 : index
    %c0_147 = arith.constant 0 : index
    %c0_148 = arith.constant 0 : index
    %c0_149 = arith.constant 0 : index
    %85 = vector.load %arg5[%c0_145, %c1_146, %c0_147, %c0_148, %c0_149] : memref<2x7x1x14x128xf32, #tpu.memory_space<vmem>>, vector<1x1x1x8x128xf32>
    %86 = vector.shape_cast %85 : vector<1x1x1x8x128xf32> to vector<1x8x128xf32>
    %87 = vector.broadcast %83 : f32 to vector<1x8x128xf32>
    %88 = arith.mulf %87, %86 : vector<1x8x128xf32>
    %89 = arith.addf %82, %88 : vector<1x8x128xf32>
    %c1_150 = arith.constant 1 : index
    %c1_151 = arith.constant 1 : index
    %c0_152 = arith.constant 0 : index
    %c0_153 = arith.constant 0 : index
    %c0_154 = arith.constant 0 : index
    %90 = vector.load %arg5[%c1_150, %c1_151, %c0_152, %c0_153, %c0_154] : memref<2x7x1x14x128xf32, #tpu.memory_space<vmem>>, vector<1x1x1x8x128xf32>
    %91 = vector.shape_cast %90 : vector<1x1x1x8x128xf32> to vector<1x8x128xf32>
    %92 = vector.broadcast %84 : f32 to vector<1x8x128xf32>
    %93 = arith.mulf %92, %91 : vector<1x8x128xf32>
    %94 = arith.addf %89, %93 : vector<1x8x128xf32>
    %c2_155 = arith.constant 2 : index
    %95 = memref.load %arg2[%c2_155] : memref<98xf32, #tpu.memory_space<smem>>
    %c51 = arith.constant 51 : index
    %96 = memref.load %arg2[%c51] : memref<98xf32, #tpu.memory_space<smem>>
    %c0_156 = arith.constant 0 : index
    %c2_157 = arith.constant 2 : index
    %c0_158 = arith.constant 0 : index
    %c0_159 = arith.constant 0 : index
    %c0_160 = arith.constant 0 : index
    %97 = vector.load %arg5[%c0_156, %c2_157, %c0_158, %c0_159, %c0_160] : memref<2x7x1x14x128xf32, #tpu.memory_space<vmem>>, vector<1x1x1x8x128xf32>
    %98 = vector.shape_cast %97 : vector<1x1x1x8x128xf32> to vector<1x8x128xf32>
    %99 = vector.broadcast %95 : f32 to vector<1x8x128xf32>
    %100 = arith.mulf %99, %98 : vector<1x8x128xf32>
    %101 = arith.addf %94, %100 : vector<1x8x128xf32>
    %c1_161 = arith.constant 1 : index
    %c2_162 = arith.constant 2 : index
    %c0_163 = arith.constant 0 : index
    %c0_164 = arith.constant 0 : index
    %c0_165 = arith.constant 0 : index
    %102 = vector.load %arg5[%c1_161, %c2_162, %c0_163, %c0_164, %c0_165] : memref<2x7x1x14x128xf32, #tpu.memory_space<vmem>>, vector<1x1x1x8x128xf32>
    %103 = vector.shape_cast %102 : vector<1x1x1x8x128xf32> to vector<1x8x128xf32>
    %104 = vector.broadcast %96 : f32 to vector<1x8x128xf32>
    %105 = arith.mulf %104, %103 : vector<1x8x128xf32>
    %106 = arith.addf %101, %105 : vector<1x8x128xf32>
    %c3_166 = arith.constant 3 : index
    %107 = memref.load %arg2[%c3_166] : memref<98xf32, #tpu.memory_space<smem>>
    %c52 = arith.constant 52 : index
    %108 = memref.load %arg2[%c52] : memref<98xf32, #tpu.memory_space<smem>>
    %c0_167 = arith.constant 0 : index
    %c3_168 = arith.constant 3 : index
    %c0_169 = arith.constant 0 : index
    %c0_170 = arith.constant 0 : index
    %c0_171 = arith.constant 0 : index
    %109 = vector.load %arg5[%c0_167, %c3_168, %c0_169, %c0_170, %c0_171] : memref<2x7x1x14x128xf32, #tpu.memory_space<vmem>>, vector<1x1x1x8x128xf32>
    %110 = vector.shape_cast %109 : vector<1x1x1x8x128xf32> to vector<1x8x128xf32>
    %111 = vector.broadcast %107 : f32 to vector<1x8x128xf32>
    %112 = arith.mulf %111, %110 : vector<1x8x128xf32>
    %113 = arith.addf %106, %112 : vector<1x8x128xf32>
    %c1_172 = arith.constant 1 : index
    %c3_173 = arith.constant 3 : index
    %c0_174 = arith.constant 0 : index
    %c0_175 = arith.constant 0 : index
    %c0_176 = arith.constant 0 : index
    %114 = vector.load %arg5[%c1_172, %c3_173, %c0_174, %c0_175, %c0_176] : memref<2x7x1x14x128xf32, #tpu.memory_space<vmem>>, vector<1x1x1x8x128xf32>
    %115 = vector.shape_cast %114 : vector<1x1x1x8x128xf32> to vector<1x8x128xf32>
    %116 = vector.broadcast %108 : f32 to vector<1x8x128xf32>
    %117 = arith.mulf %116, %115 : vector<1x8x128xf32>
    %118 = arith.addf %113, %117 : vector<1x8x128xf32>
    %c4_177 = arith.constant 4 : index
    %119 = memref.load %arg2[%c4_177] : memref<98xf32, #tpu.memory_space<smem>>
    %c53 = arith.constant 53 : index
    %120 = memref.load %arg2[%c53] : memref<98xf32, #tpu.memory_space<smem>>
    %c0_178 = arith.constant 0 : index
    %c4_179 = arith.constant 4 : index
    %c0_180 = arith.constant 0 : index
    %c0_181 = arith.constant 0 : index
    %c0_182 = arith.constant 0 : index
    %121 = vector.load %arg5[%c0_178, %c4_179, %c0_180, %c0_181, %c0_182] : memref<2x7x1x14x128xf32, #tpu.memory_space<vmem>>, vector<1x1x1x8x128xf32>
    %122 = vector.shape_cast %121 : vector<1x1x1x8x128xf32> to vector<1x8x128xf32>
    %123 = vector.broadcast %119 : f32 to vector<1x8x128xf32>
    %124 = arith.mulf %123, %122 : vector<1x8x128xf32>
    %125 = arith.addf %118, %124 : vector<1x8x128xf32>
    %c1_183 = arith.constant 1 : index
    %c4_184 = arith.constant 4 : index
    %c0_185 = arith.constant 0 : index
    %c0_186 = arith.constant 0 : index
    %c0_187 = arith.constant 0 : index
    %126 = vector.load %arg5[%c1_183, %c4_184, %c0_185, %c0_186, %c0_187] : memref<2x7x1x14x128xf32, #tpu.memory_space<vmem>>, vector<1x1x1x8x128xf32>
    %127 = vector.shape_cast %126 : vector<1x1x1x8x128xf32> to vector<1x8x128xf32>
    %128 = vector.broadcast %120 : f32 to vector<1x8x128xf32>
    %129 = arith.mulf %128, %127 : vector<1x8x128xf32>
    %130 = arith.addf %125, %129 : vector<1x8x128xf32>
    %c5_188 = arith.constant 5 : index
    %131 = memref.load %arg2[%c5_188] : memref<98xf32, #tpu.memory_space<smem>>
    %c54 = arith.constant 54 : index
    %132 = memref.load %arg2[%c54] : memref<98xf32, #tpu.memory_space<smem>>
    %c0_189 = arith.constant 0 : index
    %c5_190 = arith.constant 5 : index
    %c0_191 = arith.constant 0 : index
    %c0_192 = arith.constant 0 : index
    %c0_193 = arith.constant 0 : index
    %133 = vector.load %arg5[%c0_189, %c5_190, %c0_191, %c0_192, %c0_193] : memref<2x7x1x14x128xf32, #tpu.memory_space<vmem>>, vector<1x1x1x8x128xf32>
    %134 = vector.shape_cast %133 : vector<1x1x1x8x128xf32> to vector<1x8x128xf32>
    %135 = vector.broadcast %131 : f32 to vector<1x8x128xf32>
    %136 = arith.mulf %135, %134 : vector<1x8x128xf32>
    %137 = arith.addf %130, %136 : vector<1x8x128xf32>
    %c1_194 = arith.constant 1 : index
    %c5_195 = arith.constant 5 : index
    %c0_196 = arith.constant 0 : index
    %c0_197 = arith.constant 0 : index
    %c0_198 = arith.constant 0 : index
    %138 = vector.load %arg5[%c1_194, %c5_195, %c0_196, %c0_197, %c0_198] : memref<2x7x1x14x128xf32, #tpu.memory_space<vmem>>, vector<1x1x1x8x128xf32>
    %139 = vector.shape_cast %138 : vector<1x1x1x8x128xf32> to vector<1x8x128xf32>
    %140 = vector.broadcast %132 : f32 to vector<1x8x128xf32>
    %141 = arith.mulf %140, %139 : vector<1x8x128xf32>
    %142 = arith.addf %137, %141 : vector<1x8x128xf32>
    %c6_199 = arith.constant 6 : index
    %143 = memref.load %arg2[%c6_199] : memref<98xf32, #tpu.memory_space<smem>>
    %c55 = arith.constant 55 : index
    %144 = memref.load %arg2[%c55] : memref<98xf32, #tpu.memory_space<smem>>
    %c0_200 = arith.constant 0 : index
    %c6_201 = arith.constant 6 : index
    %c0_202 = arith.constant 0 : index
    %c0_203 = arith.constant 0 : index
    %c0_204 = arith.constant 0 : index
    %145 = vector.load %arg5[%c0_200, %c6_201, %c0_202, %c0_203, %c0_204] : memref<2x7x1x14x128xf32, #tpu.memory_space<vmem>>, vector<1x1x1x8x128xf32>
    %146 = vector.shape_cast %145 : vector<1x1x1x8x128xf32> to vector<1x8x128xf32>
    %147 = vector.broadcast %143 : f32 to vector<1x8x128xf32>
    %148 = arith.mulf %147, %146 : vector<1x8x128xf32>
    %149 = arith.addf %142, %148 : vector<1x8x128xf32>
    %c1_205 = arith.constant 1 : index
    %c6_206 = arith.constant 6 : index
    %c0_207 = arith.constant 0 : index
    %c0_208 = arith.constant 0 : index
    %c0_209 = arith.constant 0 : index
    %150 = vector.load %arg5[%c1_205, %c6_206, %c0_207, %c0_208, %c0_209] : memref<2x7x1x14x128xf32, #tpu.memory_space<vmem>>, vector<1x1x1x8x128xf32>
    %151 = vector.shape_cast %150 : vector<1x1x1x8x128xf32> to vector<1x8x128xf32>
    %152 = vector.broadcast %144 : f32 to vector<1x8x128xf32>
    %153 = arith.mulf %152, %151 : vector<1x8x128xf32>
    %154 = arith.addf %149, %153 : vector<1x8x128xf32>
    %c7 = arith.constant 7 : index
    %155 = memref.load %arg2[%c7] : memref<98xf32, #tpu.memory_space<smem>>
    %c56 = arith.constant 56 : index
    %156 = memref.load %arg2[%c56] : memref<98xf32, #tpu.memory_space<smem>>
    %c0_210 = arith.constant 0 : index
    %c0_211 = arith.constant 0 : index
    %c0_212 = arith.constant 0 : index
    %c1_213 = arith.constant 1 : index
    %c0_214 = arith.constant 0 : index
    %157 = vector.load %arg5[%c0_210, %c0_211, %c0_212, %c1_213, %c0_214] : memref<2x7x1x14x128xf32, #tpu.memory_space<vmem>>, vector<1x1x1x8x128xf32>
    %158 = vector.shape_cast %157 : vector<1x1x1x8x128xf32> to vector<1x8x128xf32>
    %159 = vector.broadcast %155 : f32 to vector<1x8x128xf32>
    %160 = arith.mulf %159, %158 : vector<1x8x128xf32>
    %161 = arith.addf %154, %160 : vector<1x8x128xf32>
    %c1_215 = arith.constant 1 : index
    %c0_216 = arith.constant 0 : index
    %c0_217 = arith.constant 0 : index
    %c1_218 = arith.constant 1 : index
    %c0_219 = arith.constant 0 : index
    %162 = vector.load %arg5[%c1_215, %c0_216, %c0_217, %c1_218, %c0_219] : memref<2x7x1x14x128xf32, #tpu.memory_space<vmem>>, vector<1x1x1x8x128xf32>
    %163 = vector.shape_cast %162 : vector<1x1x1x8x128xf32> to vector<1x8x128xf32>
    %164 = vector.broadcast %156 : f32 to vector<1x8x128xf32>
    %165 = arith.mulf %164, %163 : vector<1x8x128xf32>
    %166 = arith.addf %161, %165 : vector<1x8x128xf32>
    %c8 = arith.constant 8 : index
    %167 = memref.load %arg2[%c8] : memref<98xf32, #tpu.memory_space<smem>>
    %c57 = arith.constant 57 : index
    %168 = memref.load %arg2[%c57] : memref<98xf32, #tpu.memory_space<smem>>
    %c0_220 = arith.constant 0 : index
    %c1_221 = arith.constant 1 : index
    %c0_222 = arith.constant 0 : index
    %c1_223 = arith.constant 1 : index
    %c0_224 = arith.constant 0 : index
    %169 = vector.load %arg5[%c0_220, %c1_221, %c0_222, %c1_223, %c0_224] : memref<2x7x1x14x128xf32, #tpu.memory_space<vmem>>, vector<1x1x1x8x128xf32>
    %170 = vector.shape_cast %169 : vector<1x1x1x8x128xf32> to vector<1x8x128xf32>
    %171 = vector.broadcast %167 : f32 to vector<1x8x128xf32>
    %172 = arith.mulf %171, %170 : vector<1x8x128xf32>
    %173 = arith.addf %166, %172 : vector<1x8x128xf32>
    %c1_225 = arith.constant 1 : index
    %c1_226 = arith.constant 1 : index
    %c0_227 = arith.constant 0 : index
    %c1_228 = arith.constant 1 : index
    %c0_229 = arith.constant 0 : index
    %174 = vector.load %arg5[%c1_225, %c1_226, %c0_227, %c1_228, %c0_229] : memref<2x7x1x14x128xf32, #tpu.memory_space<vmem>>, vector<1x1x1x8x128xf32>
    %175 = vector.shape_cast %174 : vector<1x1x1x8x128xf32> to vector<1x8x128xf32>
    %176 = vector.broadcast %168 : f32 to vector<1x8x128xf32>
    %177 = arith.mulf %176, %175 : vector<1x8x128xf32>
    %178 = arith.addf %173, %177 : vector<1x8x128xf32>
    %c9 = arith.constant 9 : index
    %179 = memref.load %arg2[%c9] : memref<98xf32, #tpu.memory_space<smem>>
    %c58 = arith.constant 58 : index
    %180 = memref.load %arg2[%c58] : memref<98xf32, #tpu.memory_space<smem>>
    %c0_230 = arith.constant 0 : index
    %c2_231 = arith.constant 2 : index
    %c0_232 = arith.constant 0 : index
    %c1_233 = arith.constant 1 : index
    %c0_234 = arith.constant 0 : index
    %181 = vector.load %arg5[%c0_230, %c2_231, %c0_232, %c1_233, %c0_234] : memref<2x7x1x14x128xf32, #tpu.memory_space<vmem>>, vector<1x1x1x8x128xf32>
    %182 = vector.shape_cast %181 : vector<1x1x1x8x128xf32> to vector<1x8x128xf32>
    %183 = vector.broadcast %179 : f32 to vector<1x8x128xf32>
    %184 = arith.mulf %183, %182 : vector<1x8x128xf32>
    %185 = arith.addf %178, %184 : vector<1x8x128xf32>
    %c1_235 = arith.constant 1 : index
    %c2_236 = arith.constant 2 : index
    %c0_237 = arith.constant 0 : index
    %c1_238 = arith.constant 1 : index
    %c0_239 = arith.constant 0 : index
    %186 = vector.load %arg5[%c1_235, %c2_236, %c0_237, %c1_238, %c0_239] : memref<2x7x1x14x128xf32, #tpu.memory_space<vmem>>, vector<1x1x1x8x128xf32>
    %187 = vector.shape_cast %186 : vector<1x1x1x8x128xf32> to vector<1x8x128xf32>
    %188 = vector.broadcast %180 : f32 to vector<1x8x128xf32>
    %189 = arith.mulf %188, %187 : vector<1x8x128xf32>
    %190 = arith.addf %185, %189 : vector<1x8x128xf32>
    %c10 = arith.constant 10 : index
    %191 = memref.load %arg2[%c10] : memref<98xf32, #tpu.memory_space<smem>>
    %c59 = arith.constant 59 : index
    %192 = memref.load %arg2[%c59] : memref<98xf32, #tpu.memory_space<smem>>
    %c0_240 = arith.constant 0 : index
    %c3_241 = arith.constant 3 : index
    %c0_242 = arith.constant 0 : index
    %c1_243 = arith.constant 1 : index
    %c0_244 = arith.constant 0 : index
    %193 = vector.load %arg5[%c0_240, %c3_241, %c0_242, %c1_243, %c0_244] : memref<2x7x1x14x128xf32, #tpu.memory_space<vmem>>, vector<1x1x1x8x128xf32>
    %194 = vector.shape_cast %193 : vector<1x1x1x8x128xf32> to vector<1x8x128xf32>
    %195 = vector.broadcast %191 : f32 to vector<1x8x128xf32>
    %196 = arith.mulf %195, %194 : vector<1x8x128xf32>
    %197 = arith.addf %190, %196 : vector<1x8x128xf32>
    %c1_245 = arith.constant 1 : index
    %c3_246 = arith.constant 3 : index
    %c0_247 = arith.constant 0 : index
    %c1_248 = arith.constant 1 : index
    %c0_249 = arith.constant 0 : index
    %198 = vector.load %arg5[%c1_245, %c3_246, %c0_247, %c1_248, %c0_249] : memref<2x7x1x14x128xf32, #tpu.memory_space<vmem>>, vector<1x1x1x8x128xf32>
    %199 = vector.shape_cast %198 : vector<1x1x1x8x128xf32> to vector<1x8x128xf32>
    %200 = vector.broadcast %192 : f32 to vector<1x8x128xf32>
    %201 = arith.mulf %200, %199 : vector<1x8x128xf32>
    %202 = arith.addf %197, %201 : vector<1x8x128xf32>
    %c11 = arith.constant 11 : index
    %203 = memref.load %arg2[%c11] : memref<98xf32, #tpu.memory_space<smem>>
    %c60 = arith.constant 60 : index
    %204 = memref.load %arg2[%c60] : memref<98xf32, #tpu.memory_space<smem>>
    %c0_250 = arith.constant 0 : index
    %c4_251 = arith.constant 4 : index
    %c0_252 = arith.constant 0 : index
    %c1_253 = arith.constant 1 : index
    %c0_254 = arith.constant 0 : index
    %205 = vector.load %arg5[%c0_250, %c4_251, %c0_252, %c1_253, %c0_254] : memref<2x7x1x14x128xf32, #tpu.memory_space<vmem>>, vector<1x1x1x8x128xf32>
    %206 = vector.shape_cast %205 : vector<1x1x1x8x128xf32> to vector<1x8x128xf32>
    %207 = vector.broadcast %203 : f32 to vector<1x8x128xf32>
    %208 = arith.mulf %207, %206 : vector<1x8x128xf32>
    %209 = arith.addf %202, %208 : vector<1x8x128xf32>
    %c1_255 = arith.constant 1 : index
    %c4_256 = arith.constant 4 : index
    %c0_257 = arith.constant 0 : index
    %c1_258 = arith.constant 1 : index
    %c0_259 = arith.constant 0 : index
    %210 = vector.load %arg5[%c1_255, %c4_256, %c0_257, %c1_258, %c0_259] : memref<2x7x1x14x128xf32, #tpu.memory_space<vmem>>, vector<1x1x1x8x128xf32>
    %211 = vector.shape_cast %210 : vector<1x1x1x8x128xf32> to vector<1x8x128xf32>
    %212 = vector.broadcast %204 : f32 to vector<1x8x128xf32>
    %213 = arith.mulf %212, %211 : vector<1x8x128xf32>
    %214 = arith.addf %209, %213 : vector<1x8x128xf32>
    %c12 = arith.constant 12 : index
    %215 = memref.load %arg2[%c12] : memref<98xf32, #tpu.memory_space<smem>>
    %c61 = arith.constant 61 : index
    %216 = memref.load %arg2[%c61] : memref<98xf32, #tpu.memory_space<smem>>
    %c0_260 = arith.constant 0 : index
    %c5_261 = arith.constant 5 : index
    %c0_262 = arith.constant 0 : index
    %c1_263 = arith.constant 1 : index
    %c0_264 = arith.constant 0 : index
    %217 = vector.load %arg5[%c0_260, %c5_261, %c0_262, %c1_263, %c0_264] : memref<2x7x1x14x128xf32, #tpu.memory_space<vmem>>, vector<1x1x1x8x128xf32>
    %218 = vector.shape_cast %217 : vector<1x1x1x8x128xf32> to vector<1x8x128xf32>
    %219 = vector.broadcast %215 : f32 to vector<1x8x128xf32>
    %220 = arith.mulf %219, %218 : vector<1x8x128xf32>
    %221 = arith.addf %214, %220 : vector<1x8x128xf32>
    %c1_265 = arith.constant 1 : index
    %c5_266 = arith.constant 5 : index
    %c0_267 = arith.constant 0 : index
    %c1_268 = arith.constant 1 : index
    %c0_269 = arith.constant 0 : index
    %222 = vector.load %arg5[%c1_265, %c5_266, %c0_267, %c1_268, %c0_269] : memref<2x7x1x14x128xf32, #tpu.memory_space<vmem>>, vector<1x1x1x8x128xf32>
    %223 = vector.shape_cast %222 : vector<1x1x1x8x128xf32> to vector<1x8x128xf32>
    %224 = vector.broadcast %216 : f32 to vector<1x8x128xf32>
    %225 = arith.mulf %224, %223 : vector<1x8x128xf32>
    %226 = arith.addf %221, %225 : vector<1x8x128xf32>
    %c13 = arith.constant 13 : index
    %227 = memref.load %arg2[%c13] : memref<98xf32, #tpu.memory_space<smem>>
    %c62 = arith.constant 62 : index
    %228 = memref.load %arg2[%c62] : memref<98xf32, #tpu.memory_space<smem>>
    %c0_270 = arith.constant 0 : index
    %c6_271 = arith.constant 6 : index
    %c0_272 = arith.constant 0 : index
    %c1_273 = arith.constant 1 : index
    %c0_274 = arith.constant 0 : index
    %229 = vector.load %arg5[%c0_270, %c6_271, %c0_272, %c1_273, %c0_274] : memref<2x7x1x14x128xf32, #tpu.memory_space<vmem>>, vector<1x1x1x8x128xf32>
    %230 = vector.shape_cast %229 : vector<1x1x1x8x128xf32> to vector<1x8x128xf32>
    %231 = vector.broadcast %227 : f32 to vector<1x8x128xf32>
    %232 = arith.mulf %231, %230 : vector<1x8x128xf32>
    %233 = arith.addf %226, %232 : vector<1x8x128xf32>
    %c1_275 = arith.constant 1 : index
    %c6_276 = arith.constant 6 : index
    %c0_277 = arith.constant 0 : index
    %c1_278 = arith.constant 1 : index
    %c0_279 = arith.constant 0 : index
    %234 = vector.load %arg5[%c1_275, %c6_276, %c0_277, %c1_278, %c0_279] : memref<2x7x1x14x128xf32, #tpu.memory_space<vmem>>, vector<1x1x1x8x128xf32>
    %235 = vector.shape_cast %234 : vector<1x1x1x8x128xf32> to vector<1x8x128xf32>
    %236 = vector.broadcast %228 : f32 to vector<1x8x128xf32>
    %237 = arith.mulf %236, %235 : vector<1x8x128xf32>
    %238 = arith.addf %233, %237 : vector<1x8x128xf32>
    %c14 = arith.constant 14 : index
    %239 = memref.load %arg2[%c14] : memref<98xf32, #tpu.memory_space<smem>>
    %c63 = arith.constant 63 : index
    %240 = memref.load %arg2[%c63] : memref<98xf32, #tpu.memory_space<smem>>
    %c0_280 = arith.constant 0 : index
    %c0_281 = arith.constant 0 : index
    %c0_282 = arith.constant 0 : index
    %c2_283 = arith.constant 2 : index
    %c0_284 = arith.constant 0 : index
    %241 = vector.load %arg5[%c0_280, %c0_281, %c0_282, %c2_283, %c0_284] : memref<2x7x1x14x128xf32, #tpu.memory_space<vmem>>, vector<1x1x1x8x128xf32>
    %242 = vector.shape_cast %241 : vector<1x1x1x8x128xf32> to vector<1x8x128xf32>
    %243 = vector.broadcast %239 : f32 to vector<1x8x128xf32>
    %244 = arith.mulf %243, %242 : vector<1x8x128xf32>
    %245 = arith.addf %238, %244 : vector<1x8x128xf32>
    %c1_285 = arith.constant 1 : index
    %c0_286 = arith.constant 0 : index
    %c0_287 = arith.constant 0 : index
    %c2_288 = arith.constant 2 : index
    %c0_289 = arith.constant 0 : index
    %246 = vector.load %arg5[%c1_285, %c0_286, %c0_287, %c2_288, %c0_289] : memref<2x7x1x14x128xf32, #tpu.memory_space<vmem>>, vector<1x1x1x8x128xf32>
    %247 = vector.shape_cast %246 : vector<1x1x1x8x128xf32> to vector<1x8x128xf32>
    %248 = vector.broadcast %240 : f32 to vector<1x8x128xf32>
    %249 = arith.mulf %248, %247 : vector<1x8x128xf32>
    %250 = arith.addf %245, %249 : vector<1x8x128xf32>
    %c15 = arith.constant 15 : index
    %251 = memref.load %arg2[%c15] : memref<98xf32, #tpu.memory_space<smem>>
    %c64 = arith.constant 64 : index
    %252 = memref.load %arg2[%c64] : memref<98xf32, #tpu.memory_space<smem>>
    %c0_290 = arith.constant 0 : index
    %c1_291 = arith.constant 1 : index
    %c0_292 = arith.constant 0 : index
    %c2_293 = arith.constant 2 : index
    %c0_294 = arith.constant 0 : index
    %253 = vector.load %arg5[%c0_290, %c1_291, %c0_292, %c2_293, %c0_294] : memref<2x7x1x14x128xf32, #tpu.memory_space<vmem>>, vector<1x1x1x8x128xf32>
    %254 = vector.shape_cast %253 : vector<1x1x1x8x128xf32> to vector<1x8x128xf32>
    %255 = vector.broadcast %251 : f32 to vector<1x8x128xf32>
    %256 = arith.mulf %255, %254 : vector<1x8x128xf32>
    %257 = arith.addf %250, %256 : vector<1x8x128xf32>
    %c1_295 = arith.constant 1 : index
    %c1_296 = arith.constant 1 : index
    %c0_297 = arith.constant 0 : index
    %c2_298 = arith.constant 2 : index
    %c0_299 = arith.constant 0 : index
    %258 = vector.load %arg5[%c1_295, %c1_296, %c0_297, %c2_298, %c0_299] : memref<2x7x1x14x128xf32, #tpu.memory_space<vmem>>, vector<1x1x1x8x128xf32>
    %259 = vector.shape_cast %258 : vector<1x1x1x8x128xf32> to vector<1x8x128xf32>
    %260 = vector.broadcast %252 : f32 to vector<1x8x128xf32>
    %261 = arith.mulf %260, %259 : vector<1x8x128xf32>
    %262 = arith.addf %257, %261 : vector<1x8x128xf32>
    %c16 = arith.constant 16 : index
    %263 = memref.load %arg2[%c16] : memref<98xf32, #tpu.memory_space<smem>>
    %c65 = arith.constant 65 : index
    %264 = memref.load %arg2[%c65] : memref<98xf32, #tpu.memory_space<smem>>
    %c0_300 = arith.constant 0 : index
    %c2_301 = arith.constant 2 : index
    %c0_302 = arith.constant 0 : index
    %c2_303 = arith.constant 2 : index
    %c0_304 = arith.constant 0 : index
    %265 = vector.load %arg5[%c0_300, %c2_301, %c0_302, %c2_303, %c0_304] : memref<2x7x1x14x128xf32, #tpu.memory_space<vmem>>, vector<1x1x1x8x128xf32>
    %266 = vector.shape_cast %265 : vector<1x1x1x8x128xf32> to vector<1x8x128xf32>
    %267 = vector.broadcast %263 : f32 to vector<1x8x128xf32>
    %268 = arith.mulf %267, %266 : vector<1x8x128xf32>
    %269 = arith.addf %262, %268 : vector<1x8x128xf32>
    %c1_305 = arith.constant 1 : index
    %c2_306 = arith.constant 2 : index
    %c0_307 = arith.constant 0 : index
    %c2_308 = arith.constant 2 : index
    %c0_309 = arith.constant 0 : index
    %270 = vector.load %arg5[%c1_305, %c2_306, %c0_307, %c2_308, %c0_309] : memref<2x7x1x14x128xf32, #tpu.memory_space<vmem>>, vector<1x1x1x8x128xf32>
    %271 = vector.shape_cast %270 : vector<1x1x1x8x128xf32> to vector<1x8x128xf32>
    %272 = vector.broadcast %264 : f32 to vector<1x8x128xf32>
    %273 = arith.mulf %272, %271 : vector<1x8x128xf32>
    %274 = arith.addf %269, %273 : vector<1x8x128xf32>
    %c17 = arith.constant 17 : index
    %275 = memref.load %arg2[%c17] : memref<98xf32, #tpu.memory_space<smem>>
    %c66 = arith.constant 66 : index
    %276 = memref.load %arg2[%c66] : memref<98xf32, #tpu.memory_space<smem>>
    %c0_310 = arith.constant 0 : index
    %c3_311 = arith.constant 3 : index
    %c0_312 = arith.constant 0 : index
    %c2_313 = arith.constant 2 : index
    %c0_314 = arith.constant 0 : index
    %277 = vector.load %arg5[%c0_310, %c3_311, %c0_312, %c2_313, %c0_314] : memref<2x7x1x14x128xf32, #tpu.memory_space<vmem>>, vector<1x1x1x8x128xf32>
    %278 = vector.shape_cast %277 : vector<1x1x1x8x128xf32> to vector<1x8x128xf32>
    %279 = vector.broadcast %275 : f32 to vector<1x8x128xf32>
    %280 = arith.mulf %279, %278 : vector<1x8x128xf32>
    %281 = arith.addf %274, %280 : vector<1x8x128xf32>
    %c1_315 = arith.constant 1 : index
    %c3_316 = arith.constant 3 : index
    %c0_317 = arith.constant 0 : index
    %c2_318 = arith.constant 2 : index
    %c0_319 = arith.constant 0 : index
    %282 = vector.load %arg5[%c1_315, %c3_316, %c0_317, %c2_318, %c0_319] : memref<2x7x1x14x128xf32, #tpu.memory_space<vmem>>, vector<1x1x1x8x128xf32>
    %283 = vector.shape_cast %282 : vector<1x1x1x8x128xf32> to vector<1x8x128xf32>
    %284 = vector.broadcast %276 : f32 to vector<1x8x128xf32>
    %285 = arith.mulf %284, %283 : vector<1x8x128xf32>
    %286 = arith.addf %281, %285 : vector<1x8x128xf32>
    %c18 = arith.constant 18 : index
    %287 = memref.load %arg2[%c18] : memref<98xf32, #tpu.memory_space<smem>>
    %c67 = arith.constant 67 : index
    %288 = memref.load %arg2[%c67] : memref<98xf32, #tpu.memory_space<smem>>
    %c0_320 = arith.constant 0 : index
    %c4_321 = arith.constant 4 : index
    %c0_322 = arith.constant 0 : index
    %c2_323 = arith.constant 2 : index
    %c0_324 = arith.constant 0 : index
    %289 = vector.load %arg5[%c0_320, %c4_321, %c0_322, %c2_323, %c0_324] : memref<2x7x1x14x128xf32, #tpu.memory_space<vmem>>, vector<1x1x1x8x128xf32>
    %290 = vector.shape_cast %289 : vector<1x1x1x8x128xf32> to vector<1x8x128xf32>
    %291 = vector.broadcast %287 : f32 to vector<1x8x128xf32>
    %292 = arith.mulf %291, %290 : vector<1x8x128xf32>
    %293 = arith.addf %286, %292 : vector<1x8x128xf32>
    %c1_325 = arith.constant 1 : index
    %c4_326 = arith.constant 4 : index
    %c0_327 = arith.constant 0 : index
    %c2_328 = arith.constant 2 : index
    %c0_329 = arith.constant 0 : index
    %294 = vector.load %arg5[%c1_325, %c4_326, %c0_327, %c2_328, %c0_329] : memref<2x7x1x14x128xf32, #tpu.memory_space<vmem>>, vector<1x1x1x8x128xf32>
    %295 = vector.shape_cast %294 : vector<1x1x1x8x128xf32> to vector<1x8x128xf32>
    %296 = vector.broadcast %288 : f32 to vector<1x8x128xf32>
    %297 = arith.mulf %296, %295 : vector<1x8x128xf32>
    %298 = arith.addf %293, %297 : vector<1x8x128xf32>
    %c19 = arith.constant 19 : index
    %299 = memref.load %arg2[%c19] : memref<98xf32, #tpu.memory_space<smem>>
    %c68 = arith.constant 68 : index
    %300 = memref.load %arg2[%c68] : memref<98xf32, #tpu.memory_space<smem>>
    %c0_330 = arith.constant 0 : index
    %c5_331 = arith.constant 5 : index
    %c0_332 = arith.constant 0 : index
    %c2_333 = arith.constant 2 : index
    %c0_334 = arith.constant 0 : index
    %301 = vector.load %arg5[%c0_330, %c5_331, %c0_332, %c2_333, %c0_334] : memref<2x7x1x14x128xf32, #tpu.memory_space<vmem>>, vector<1x1x1x8x128xf32>
    %302 = vector.shape_cast %301 : vector<1x1x1x8x128xf32> to vector<1x8x128xf32>
    %303 = vector.broadcast %299 : f32 to vector<1x8x128xf32>
    %304 = arith.mulf %303, %302 : vector<1x8x128xf32>
    %305 = arith.addf %298, %304 : vector<1x8x128xf32>
    %c1_335 = arith.constant 1 : index
    %c5_336 = arith.constant 5 : index
    %c0_337 = arith.constant 0 : index
    %c2_338 = arith.constant 2 : index
    %c0_339 = arith.constant 0 : index
    %306 = vector.load %arg5[%c1_335, %c5_336, %c0_337, %c2_338, %c0_339] : memref<2x7x1x14x128xf32, #tpu.memory_space<vmem>>, vector<1x1x1x8x128xf32>
    %307 = vector.shape_cast %306 : vector<1x1x1x8x128xf32> to vector<1x8x128xf32>
    %308 = vector.broadcast %300 : f32 to vector<1x8x128xf32>
    %309 = arith.mulf %308, %307 : vector<1x8x128xf32>
    %310 = arith.addf %305, %309 : vector<1x8x128xf32>
    %c20 = arith.constant 20 : index
    %311 = memref.load %arg2[%c20] : memref<98xf32, #tpu.memory_space<smem>>
    %c69 = arith.constant 69 : index
    %312 = memref.load %arg2[%c69] : memref<98xf32, #tpu.memory_space<smem>>
    %c0_340 = arith.constant 0 : index
    %c6_341 = arith.constant 6 : index
    %c0_342 = arith.constant 0 : index
    %c2_343 = arith.constant 2 : index
    %c0_344 = arith.constant 0 : index
    %313 = vector.load %arg5[%c0_340, %c6_341, %c0_342, %c2_343, %c0_344] : memref<2x7x1x14x128xf32, #tpu.memory_space<vmem>>, vector<1x1x1x8x128xf32>
    %314 = vector.shape_cast %313 : vector<1x1x1x8x128xf32> to vector<1x8x128xf32>
    %315 = vector.broadcast %311 : f32 to vector<1x8x128xf32>
    %316 = arith.mulf %315, %314 : vector<1x8x128xf32>
    %317 = arith.addf %310, %316 : vector<1x8x128xf32>
    %c1_345 = arith.constant 1 : index
    %c6_346 = arith.constant 6 : index
    %c0_347 = arith.constant 0 : index
    %c2_348 = arith.constant 2 : index
    %c0_349 = arith.constant 0 : index
    %318 = vector.load %arg5[%c1_345, %c6_346, %c0_347, %c2_348, %c0_349] : memref<2x7x1x14x128xf32, #tpu.memory_space<vmem>>, vector<1x1x1x8x128xf32>
    %319 = vector.shape_cast %318 : vector<1x1x1x8x128xf32> to vector<1x8x128xf32>
    %320 = vector.broadcast %312 : f32 to vector<1x8x128xf32>
    %321 = arith.mulf %320, %319 : vector<1x8x128xf32>
    %322 = arith.addf %317, %321 : vector<1x8x128xf32>
    %c21 = arith.constant 21 : index
    %323 = memref.load %arg2[%c21] : memref<98xf32, #tpu.memory_space<smem>>
    %c70 = arith.constant 70 : index
    %324 = memref.load %arg2[%c70] : memref<98xf32, #tpu.memory_space<smem>>
    %c0_350 = arith.constant 0 : index
    %c0_351 = arith.constant 0 : index
    %c0_352 = arith.constant 0 : index
    %c3_353 = arith.constant 3 : index
    %c0_354 = arith.constant 0 : index
    %325 = vector.load %arg5[%c0_350, %c0_351, %c0_352, %c3_353, %c0_354] : memref<2x7x1x14x128xf32, #tpu.memory_space<vmem>>, vector<1x1x1x8x128xf32>
    %326 = vector.shape_cast %325 : vector<1x1x1x8x128xf32> to vector<1x8x128xf32>
    %327 = vector.broadcast %323 : f32 to vector<1x8x128xf32>
    %328 = arith.mulf %327, %326 : vector<1x8x128xf32>
    %329 = arith.addf %322, %328 : vector<1x8x128xf32>
    %c1_355 = arith.constant 1 : index
    %c0_356 = arith.constant 0 : index
    %c0_357 = arith.constant 0 : index
    %c3_358 = arith.constant 3 : index
    %c0_359 = arith.constant 0 : index
    %330 = vector.load %arg5[%c1_355, %c0_356, %c0_357, %c3_358, %c0_359] : memref<2x7x1x14x128xf32, #tpu.memory_space<vmem>>, vector<1x1x1x8x128xf32>
    %331 = vector.shape_cast %330 : vector<1x1x1x8x128xf32> to vector<1x8x128xf32>
    %332 = vector.broadcast %324 : f32 to vector<1x8x128xf32>
    %333 = arith.mulf %332, %331 : vector<1x8x128xf32>
    %334 = arith.addf %329, %333 : vector<1x8x128xf32>
    %c22 = arith.constant 22 : index
    %335 = memref.load %arg2[%c22] : memref<98xf32, #tpu.memory_space<smem>>
    %c71 = arith.constant 71 : index
    %336 = memref.load %arg2[%c71] : memref<98xf32, #tpu.memory_space<smem>>
    %c0_360 = arith.constant 0 : index
    %c1_361 = arith.constant 1 : index
    %c0_362 = arith.constant 0 : index
    %c3_363 = arith.constant 3 : index
    %c0_364 = arith.constant 0 : index
    %337 = vector.load %arg5[%c0_360, %c1_361, %c0_362, %c3_363, %c0_364] : memref<2x7x1x14x128xf32, #tpu.memory_space<vmem>>, vector<1x1x1x8x128xf32>
    %338 = vector.shape_cast %337 : vector<1x1x1x8x128xf32> to vector<1x8x128xf32>
    %339 = vector.broadcast %335 : f32 to vector<1x8x128xf32>
    %340 = arith.mulf %339, %338 : vector<1x8x128xf32>
    %341 = arith.addf %334, %340 : vector<1x8x128xf32>
    %c1_365 = arith.constant 1 : index
    %c1_366 = arith.constant 1 : index
    %c0_367 = arith.constant 0 : index
    %c3_368 = arith.constant 3 : index
    %c0_369 = arith.constant 0 : index
    %342 = vector.load %arg5[%c1_365, %c1_366, %c0_367, %c3_368, %c0_369] : memref<2x7x1x14x128xf32, #tpu.memory_space<vmem>>, vector<1x1x1x8x128xf32>
    %343 = vector.shape_cast %342 : vector<1x1x1x8x128xf32> to vector<1x8x128xf32>
    %344 = vector.broadcast %336 : f32 to vector<1x8x128xf32>
    %345 = arith.mulf %344, %343 : vector<1x8x128xf32>
    %346 = arith.addf %341, %345 : vector<1x8x128xf32>
    %c23 = arith.constant 23 : index
    %347 = memref.load %arg2[%c23] : memref<98xf32, #tpu.memory_space<smem>>
    %c72 = arith.constant 72 : index
    %348 = memref.load %arg2[%c72] : memref<98xf32, #tpu.memory_space<smem>>
    %c0_370 = arith.constant 0 : index
    %c2_371 = arith.constant 2 : index
    %c0_372 = arith.constant 0 : index
    %c3_373 = arith.constant 3 : index
    %c0_374 = arith.constant 0 : index
    %349 = vector.load %arg5[%c0_370, %c2_371, %c0_372, %c3_373, %c0_374] : memref<2x7x1x14x128xf32, #tpu.memory_space<vmem>>, vector<1x1x1x8x128xf32>
    %350 = vector.shape_cast %349 : vector<1x1x1x8x128xf32> to vector<1x8x128xf32>
    %351 = vector.broadcast %347 : f32 to vector<1x8x128xf32>
    %352 = arith.mulf %351, %350 : vector<1x8x128xf32>
    %353 = arith.addf %346, %352 : vector<1x8x128xf32>
    %c1_375 = arith.constant 1 : index
    %c2_376 = arith.constant 2 : index
    %c0_377 = arith.constant 0 : index
    %c3_378 = arith.constant 3 : index
    %c0_379 = arith.constant 0 : index
    %354 = vector.load %arg5[%c1_375, %c2_376, %c0_377, %c3_378, %c0_379] : memref<2x7x1x14x128xf32, #tpu.memory_space<vmem>>, vector<1x1x1x8x128xf32>
    %355 = vector.shape_cast %354 : vector<1x1x1x8x128xf32> to vector<1x8x128xf32>
    %356 = vector.broadcast %348 : f32 to vector<1x8x128xf32>
    %357 = arith.mulf %356, %355 : vector<1x8x128xf32>
    %358 = arith.addf %353, %357 : vector<1x8x128xf32>
    %c24 = arith.constant 24 : index
    %359 = memref.load %arg2[%c24] : memref<98xf32, #tpu.memory_space<smem>>
    %c73 = arith.constant 73 : index
    %360 = memref.load %arg2[%c73] : memref<98xf32, #tpu.memory_space<smem>>
    %c0_380 = arith.constant 0 : index
    %c3_381 = arith.constant 3 : index
    %c0_382 = arith.constant 0 : index
    %c3_383 = arith.constant 3 : index
    %c0_384 = arith.constant 0 : index
    %361 = vector.load %arg5[%c0_380, %c3_381, %c0_382, %c3_383, %c0_384] : memref<2x7x1x14x128xf32, #tpu.memory_space<vmem>>, vector<1x1x1x8x128xf32>
    %362 = vector.shape_cast %361 : vector<1x1x1x8x128xf32> to vector<1x8x128xf32>
    %363 = vector.broadcast %359 : f32 to vector<1x8x128xf32>
    %364 = arith.mulf %363, %362 : vector<1x8x128xf32>
    %365 = arith.addf %358, %364 : vector<1x8x128xf32>
    %c1_385 = arith.constant 1 : index
    %c3_386 = arith.constant 3 : index
    %c0_387 = arith.constant 0 : index
    %c3_388 = arith.constant 3 : index
    %c0_389 = arith.constant 0 : index
    %366 = vector.load %arg5[%c1_385, %c3_386, %c0_387, %c3_388, %c0_389] : memref<2x7x1x14x128xf32, #tpu.memory_space<vmem>>, vector<1x1x1x8x128xf32>
    %367 = vector.shape_cast %366 : vector<1x1x1x8x128xf32> to vector<1x8x128xf32>
    %368 = vector.broadcast %360 : f32 to vector<1x8x128xf32>
    %369 = arith.mulf %368, %367 : vector<1x8x128xf32>
    %370 = arith.addf %365, %369 : vector<1x8x128xf32>
    %c25 = arith.constant 25 : index
    %371 = memref.load %arg2[%c25] : memref<98xf32, #tpu.memory_space<smem>>
    %c74 = arith.constant 74 : index
    %372 = memref.load %arg2[%c74] : memref<98xf32, #tpu.memory_space<smem>>
    %c0_390 = arith.constant 0 : index
    %c4_391 = arith.constant 4 : index
    %c0_392 = arith.constant 0 : index
    %c3_393 = arith.constant 3 : index
    %c0_394 = arith.constant 0 : index
    %373 = vector.load %arg5[%c0_390, %c4_391, %c0_392, %c3_393, %c0_394] : memref<2x7x1x14x128xf32, #tpu.memory_space<vmem>>, vector<1x1x1x8x128xf32>
    %374 = vector.shape_cast %373 : vector<1x1x1x8x128xf32> to vector<1x8x128xf32>
    %375 = vector.broadcast %371 : f32 to vector<1x8x128xf32>
    %376 = arith.mulf %375, %374 : vector<1x8x128xf32>
    %377 = arith.addf %370, %376 : vector<1x8x128xf32>
    %c1_395 = arith.constant 1 : index
    %c4_396 = arith.constant 4 : index
    %c0_397 = arith.constant 0 : index
    %c3_398 = arith.constant 3 : index
    %c0_399 = arith.constant 0 : index
    %378 = vector.load %arg5[%c1_395, %c4_396, %c0_397, %c3_398, %c0_399] : memref<2x7x1x14x128xf32, #tpu.memory_space<vmem>>, vector<1x1x1x8x128xf32>
    %379 = vector.shape_cast %378 : vector<1x1x1x8x128xf32> to vector<1x8x128xf32>
    %380 = vector.broadcast %372 : f32 to vector<1x8x128xf32>
    %381 = arith.mulf %380, %379 : vector<1x8x128xf32>
    %382 = arith.addf %377, %381 : vector<1x8x128xf32>
    %c26 = arith.constant 26 : index
    %383 = memref.load %arg2[%c26] : memref<98xf32, #tpu.memory_space<smem>>
    %c75 = arith.constant 75 : index
    %384 = memref.load %arg2[%c75] : memref<98xf32, #tpu.memory_space<smem>>
    %c0_400 = arith.constant 0 : index
    %c5_401 = arith.constant 5 : index
    %c0_402 = arith.constant 0 : index
    %c3_403 = arith.constant 3 : index
    %c0_404 = arith.constant 0 : index
    %385 = vector.load %arg5[%c0_400, %c5_401, %c0_402, %c3_403, %c0_404] : memref<2x7x1x14x128xf32, #tpu.memory_space<vmem>>, vector<1x1x1x8x128xf32>
    %386 = vector.shape_cast %385 : vector<1x1x1x8x128xf32> to vector<1x8x128xf32>
    %387 = vector.broadcast %383 : f32 to vector<1x8x128xf32>
    %388 = arith.mulf %387, %386 : vector<1x8x128xf32>
    %389 = arith.addf %382, %388 : vector<1x8x128xf32>
    %c1_405 = arith.constant 1 : index
    %c5_406 = arith.constant 5 : index
    %c0_407 = arith.constant 0 : index
    %c3_408 = arith.constant 3 : index
    %c0_409 = arith.constant 0 : index
    %390 = vector.load %arg5[%c1_405, %c5_406, %c0_407, %c3_408, %c0_409] : memref<2x7x1x14x128xf32, #tpu.memory_space<vmem>>, vector<1x1x1x8x128xf32>
    %391 = vector.shape_cast %390 : vector<1x1x1x8x128xf32> to vector<1x8x128xf32>
    %392 = vector.broadcast %384 : f32 to vector<1x8x128xf32>
    %393 = arith.mulf %392, %391 : vector<1x8x128xf32>
    %394 = arith.addf %389, %393 : vector<1x8x128xf32>
    %c27 = arith.constant 27 : index
    %395 = memref.load %arg2[%c27] : memref<98xf32, #tpu.memory_space<smem>>
    %c76 = arith.constant 76 : index
    %396 = memref.load %arg2[%c76] : memref<98xf32, #tpu.memory_space<smem>>
    %c0_410 = arith.constant 0 : index
    %c6_411 = arith.constant 6 : index
    %c0_412 = arith.constant 0 : index
    %c3_413 = arith.constant 3 : index
    %c0_414 = arith.constant 0 : index
    %397 = vector.load %arg5[%c0_410, %c6_411, %c0_412, %c3_413, %c0_414] : memref<2x7x1x14x128xf32, #tpu.memory_space<vmem>>, vector<1x1x1x8x128xf32>
    %398 = vector.shape_cast %397 : vector<1x1x1x8x128xf32> to vector<1x8x128xf32>
    %399 = vector.broadcast %395 : f32 to vector<1x8x128xf32>
    %400 = arith.mulf %399, %398 : vector<1x8x128xf32>
    %401 = arith.addf %394, %400 : vector<1x8x128xf32>
    %c1_415 = arith.constant 1 : index
    %c6_416 = arith.constant 6 : index
    %c0_417 = arith.constant 0 : index
    %c3_418 = arith.constant 3 : index
    %c0_419 = arith.constant 0 : index
    %402 = vector.load %arg5[%c1_415, %c6_416, %c0_417, %c3_418, %c0_419] : memref<2x7x1x14x128xf32, #tpu.memory_space<vmem>>, vector<1x1x1x8x128xf32>
    %403 = vector.shape_cast %402 : vector<1x1x1x8x128xf32> to vector<1x8x128xf32>
    %404 = vector.broadcast %396 : f32 to vector<1x8x128xf32>
    %405 = arith.mulf %404, %403 : vector<1x8x128xf32>
    %406 = arith.addf %401, %405 : vector<1x8x128xf32>
    %c28 = arith.constant 28 : index
    %407 = memref.load %arg2[%c28] : memref<98xf32, #tpu.memory_space<smem>>
    %c77 = arith.constant 77 : index
    %408 = memref.load %arg2[%c77] : memref<98xf32, #tpu.memory_space<smem>>
    %c0_420 = arith.constant 0 : index
    %c0_421 = arith.constant 0 : index
    %c0_422 = arith.constant 0 : index
    %c4_423 = arith.constant 4 : index
    %c0_424 = arith.constant 0 : index
    %409 = vector.load %arg5[%c0_420, %c0_421, %c0_422, %c4_423, %c0_424] : memref<2x7x1x14x128xf32, #tpu.memory_space<vmem>>, vector<1x1x1x8x128xf32>
    %410 = vector.shape_cast %409 : vector<1x1x1x8x128xf32> to vector<1x8x128xf32>
    %411 = vector.broadcast %407 : f32 to vector<1x8x128xf32>
    %412 = arith.mulf %411, %410 : vector<1x8x128xf32>
    %413 = arith.addf %406, %412 : vector<1x8x128xf32>
    %c1_425 = arith.constant 1 : index
    %c0_426 = arith.constant 0 : index
    %c0_427 = arith.constant 0 : index
    %c4_428 = arith.constant 4 : index
    %c0_429 = arith.constant 0 : index
    %414 = vector.load %arg5[%c1_425, %c0_426, %c0_427, %c4_428, %c0_429] : memref<2x7x1x14x128xf32, #tpu.memory_space<vmem>>, vector<1x1x1x8x128xf32>
    %415 = vector.shape_cast %414 : vector<1x1x1x8x128xf32> to vector<1x8x128xf32>
    %416 = vector.broadcast %408 : f32 to vector<1x8x128xf32>
    %417 = arith.mulf %416, %415 : vector<1x8x128xf32>
    %418 = arith.addf %413, %417 : vector<1x8x128xf32>
    %c29 = arith.constant 29 : index
    %419 = memref.load %arg2[%c29] : memref<98xf32, #tpu.memory_space<smem>>
    %c78 = arith.constant 78 : index
    %420 = memref.load %arg2[%c78] : memref<98xf32, #tpu.memory_space<smem>>
    %c0_430 = arith.constant 0 : index
    %c1_431 = arith.constant 1 : index
    %c0_432 = arith.constant 0 : index
    %c4_433 = arith.constant 4 : index
    %c0_434 = arith.constant 0 : index
    %421 = vector.load %arg5[%c0_430, %c1_431, %c0_432, %c4_433, %c0_434] : memref<2x7x1x14x128xf32, #tpu.memory_space<vmem>>, vector<1x1x1x8x128xf32>
    %422 = vector.shape_cast %421 : vector<1x1x1x8x128xf32> to vector<1x8x128xf32>
    %423 = vector.broadcast %419 : f32 to vector<1x8x128xf32>
    %424 = arith.mulf %423, %422 : vector<1x8x128xf32>
    %425 = arith.addf %418, %424 : vector<1x8x128xf32>
    %c1_435 = arith.constant 1 : index
    %c1_436 = arith.constant 1 : index
    %c0_437 = arith.constant 0 : index
    %c4_438 = arith.constant 4 : index
    %c0_439 = arith.constant 0 : index
    %426 = vector.load %arg5[%c1_435, %c1_436, %c0_437, %c4_438, %c0_439] : memref<2x7x1x14x128xf32, #tpu.memory_space<vmem>>, vector<1x1x1x8x128xf32>
    %427 = vector.shape_cast %426 : vector<1x1x1x8x128xf32> to vector<1x8x128xf32>
    %428 = vector.broadcast %420 : f32 to vector<1x8x128xf32>
    %429 = arith.mulf %428, %427 : vector<1x8x128xf32>
    %430 = arith.addf %425, %429 : vector<1x8x128xf32>
    %c30 = arith.constant 30 : index
    %431 = memref.load %arg2[%c30] : memref<98xf32, #tpu.memory_space<smem>>
    %c79 = arith.constant 79 : index
    %432 = memref.load %arg2[%c79] : memref<98xf32, #tpu.memory_space<smem>>
    %c0_440 = arith.constant 0 : index
    %c2_441 = arith.constant 2 : index
    %c0_442 = arith.constant 0 : index
    %c4_443 = arith.constant 4 : index
    %c0_444 = arith.constant 0 : index
    %433 = vector.load %arg5[%c0_440, %c2_441, %c0_442, %c4_443, %c0_444] : memref<2x7x1x14x128xf32, #tpu.memory_space<vmem>>, vector<1x1x1x8x128xf32>
    %434 = vector.shape_cast %433 : vector<1x1x1x8x128xf32> to vector<1x8x128xf32>
    %435 = vector.broadcast %431 : f32 to vector<1x8x128xf32>
    %436 = arith.mulf %435, %434 : vector<1x8x128xf32>
    %437 = arith.addf %430, %436 : vector<1x8x128xf32>
    %c1_445 = arith.constant 1 : index
    %c2_446 = arith.constant 2 : index
    %c0_447 = arith.constant 0 : index
    %c4_448 = arith.constant 4 : index
    %c0_449 = arith.constant 0 : index
    %438 = vector.load %arg5[%c1_445, %c2_446, %c0_447, %c4_448, %c0_449] : memref<2x7x1x14x128xf32, #tpu.memory_space<vmem>>, vector<1x1x1x8x128xf32>
    %439 = vector.shape_cast %438 : vector<1x1x1x8x128xf32> to vector<1x8x128xf32>
    %440 = vector.broadcast %432 : f32 to vector<1x8x128xf32>
    %441 = arith.mulf %440, %439 : vector<1x8x128xf32>
    %442 = arith.addf %437, %441 : vector<1x8x128xf32>
    %c31 = arith.constant 31 : index
    %443 = memref.load %arg2[%c31] : memref<98xf32, #tpu.memory_space<smem>>
    %c80 = arith.constant 80 : index
    %444 = memref.load %arg2[%c80] : memref<98xf32, #tpu.memory_space<smem>>
    %c0_450 = arith.constant 0 : index
    %c3_451 = arith.constant 3 : index
    %c0_452 = arith.constant 0 : index
    %c4_453 = arith.constant 4 : index
    %c0_454 = arith.constant 0 : index
    %445 = vector.load %arg5[%c0_450, %c3_451, %c0_452, %c4_453, %c0_454] : memref<2x7x1x14x128xf32, #tpu.memory_space<vmem>>, vector<1x1x1x8x128xf32>
    %446 = vector.shape_cast %445 : vector<1x1x1x8x128xf32> to vector<1x8x128xf32>
    %447 = vector.broadcast %443 : f32 to vector<1x8x128xf32>
    %448 = arith.mulf %447, %446 : vector<1x8x128xf32>
    %449 = arith.addf %442, %448 : vector<1x8x128xf32>
    %c1_455 = arith.constant 1 : index
    %c3_456 = arith.constant 3 : index
    %c0_457 = arith.constant 0 : index
    %c4_458 = arith.constant 4 : index
    %c0_459 = arith.constant 0 : index
    %450 = vector.load %arg5[%c1_455, %c3_456, %c0_457, %c4_458, %c0_459] : memref<2x7x1x14x128xf32, #tpu.memory_space<vmem>>, vector<1x1x1x8x128xf32>
    %451 = vector.shape_cast %450 : vector<1x1x1x8x128xf32> to vector<1x8x128xf32>
    %452 = vector.broadcast %444 : f32 to vector<1x8x128xf32>
    %453 = arith.mulf %452, %451 : vector<1x8x128xf32>
    %454 = arith.addf %449, %453 : vector<1x8x128xf32>
    %c32 = arith.constant 32 : index
    %455 = memref.load %arg2[%c32] : memref<98xf32, #tpu.memory_space<smem>>
    %c81 = arith.constant 81 : index
    %456 = memref.load %arg2[%c81] : memref<98xf32, #tpu.memory_space<smem>>
    %c0_460 = arith.constant 0 : index
    %c4_461 = arith.constant 4 : index
    %c0_462 = arith.constant 0 : index
    %c4_463 = arith.constant 4 : index
    %c0_464 = arith.constant 0 : index
    %457 = vector.load %arg5[%c0_460, %c4_461, %c0_462, %c4_463, %c0_464] : memref<2x7x1x14x128xf32, #tpu.memory_space<vmem>>, vector<1x1x1x8x128xf32>
    %458 = vector.shape_cast %457 : vector<1x1x1x8x128xf32> to vector<1x8x128xf32>
    %459 = vector.broadcast %455 : f32 to vector<1x8x128xf32>
    %460 = arith.mulf %459, %458 : vector<1x8x128xf32>
    %461 = arith.addf %454, %460 : vector<1x8x128xf32>
    %c1_465 = arith.constant 1 : index
    %c4_466 = arith.constant 4 : index
    %c0_467 = arith.constant 0 : index
    %c4_468 = arith.constant 4 : index
    %c0_469 = arith.constant 0 : index
    %462 = vector.load %arg5[%c1_465, %c4_466, %c0_467, %c4_468, %c0_469] : memref<2x7x1x14x128xf32, #tpu.memory_space<vmem>>, vector<1x1x1x8x128xf32>
    %463 = vector.shape_cast %462 : vector<1x1x1x8x128xf32> to vector<1x8x128xf32>
    %464 = vector.broadcast %456 : f32 to vector<1x8x128xf32>
    %465 = arith.mulf %464, %463 : vector<1x8x128xf32>
    %466 = arith.addf %461, %465 : vector<1x8x128xf32>
    %c33 = arith.constant 33 : index
    %467 = memref.load %arg2[%c33] : memref<98xf32, #tpu.memory_space<smem>>
    %c82 = arith.constant 82 : index
    %468 = memref.load %arg2[%c82] : memref<98xf32, #tpu.memory_space<smem>>
    %c0_470 = arith.constant 0 : index
    %c5_471 = arith.constant 5 : index
    %c0_472 = arith.constant 0 : index
    %c4_473 = arith.constant 4 : index
    %c0_474 = arith.constant 0 : index
    %469 = vector.load %arg5[%c0_470, %c5_471, %c0_472, %c4_473, %c0_474] : memref<2x7x1x14x128xf32, #tpu.memory_space<vmem>>, vector<1x1x1x8x128xf32>
    %470 = vector.shape_cast %469 : vector<1x1x1x8x128xf32> to vector<1x8x128xf32>
    %471 = vector.broadcast %467 : f32 to vector<1x8x128xf32>
    %472 = arith.mulf %471, %470 : vector<1x8x128xf32>
    %473 = arith.addf %466, %472 : vector<1x8x128xf32>
    %c1_475 = arith.constant 1 : index
    %c5_476 = arith.constant 5 : index
    %c0_477 = arith.constant 0 : index
    %c4_478 = arith.constant 4 : index
    %c0_479 = arith.constant 0 : index
    %474 = vector.load %arg5[%c1_475, %c5_476, %c0_477, %c4_478, %c0_479] : memref<2x7x1x14x128xf32, #tpu.memory_space<vmem>>, vector<1x1x1x8x128xf32>
    %475 = vector.shape_cast %474 : vector<1x1x1x8x128xf32> to vector<1x8x128xf32>
    %476 = vector.broadcast %468 : f32 to vector<1x8x128xf32>
    %477 = arith.mulf %476, %475 : vector<1x8x128xf32>
    %478 = arith.addf %473, %477 : vector<1x8x128xf32>
    %c34 = arith.constant 34 : index
    %479 = memref.load %arg2[%c34] : memref<98xf32, #tpu.memory_space<smem>>
    %c83 = arith.constant 83 : index
    %480 = memref.load %arg2[%c83] : memref<98xf32, #tpu.memory_space<smem>>
    %c0_480 = arith.constant 0 : index
    %c6_481 = arith.constant 6 : index
    %c0_482 = arith.constant 0 : index
    %c4_483 = arith.constant 4 : index
    %c0_484 = arith.constant 0 : index
    %481 = vector.load %arg5[%c0_480, %c6_481, %c0_482, %c4_483, %c0_484] : memref<2x7x1x14x128xf32, #tpu.memory_space<vmem>>, vector<1x1x1x8x128xf32>
    %482 = vector.shape_cast %481 : vector<1x1x1x8x128xf32> to vector<1x8x128xf32>
    %483 = vector.broadcast %479 : f32 to vector<1x8x128xf32>
    %484 = arith.mulf %483, %482 : vector<1x8x128xf32>
    %485 = arith.addf %478, %484 : vector<1x8x128xf32>
    %c1_485 = arith.constant 1 : index
    %c6_486 = arith.constant 6 : index
    %c0_487 = arith.constant 0 : index
    %c4_488 = arith.constant 4 : index
    %c0_489 = arith.constant 0 : index
    %486 = vector.load %arg5[%c1_485, %c6_486, %c0_487, %c4_488, %c0_489] : memref<2x7x1x14x128xf32, #tpu.memory_space<vmem>>, vector<1x1x1x8x128xf32>
    %487 = vector.shape_cast %486 : vector<1x1x1x8x128xf32> to vector<1x8x128xf32>
    %488 = vector.broadcast %480 : f32 to vector<1x8x128xf32>
    %489 = arith.mulf %488, %487 : vector<1x8x128xf32>
    %490 = arith.addf %485, %489 : vector<1x8x128xf32>
    %c35 = arith.constant 35 : index
    %491 = memref.load %arg2[%c35] : memref<98xf32, #tpu.memory_space<smem>>
    %c84 = arith.constant 84 : index
    %492 = memref.load %arg2[%c84] : memref<98xf32, #tpu.memory_space<smem>>
    %c0_490 = arith.constant 0 : index
    %c0_491 = arith.constant 0 : index
    %c0_492 = arith.constant 0 : index
    %c5_493 = arith.constant 5 : index
    %c0_494 = arith.constant 0 : index
    %493 = vector.load %arg5[%c0_490, %c0_491, %c0_492, %c5_493, %c0_494] : memref<2x7x1x14x128xf32, #tpu.memory_space<vmem>>, vector<1x1x1x8x128xf32>
    %494 = vector.shape_cast %493 : vector<1x1x1x8x128xf32> to vector<1x8x128xf32>
    %495 = vector.broadcast %491 : f32 to vector<1x8x128xf32>
    %496 = arith.mulf %495, %494 : vector<1x8x128xf32>
    %497 = arith.addf %490, %496 : vector<1x8x128xf32>
    %c1_495 = arith.constant 1 : index
    %c0_496 = arith.constant 0 : index
    %c0_497 = arith.constant 0 : index
    %c5_498 = arith.constant 5 : index
    %c0_499 = arith.constant 0 : index
    %498 = vector.load %arg5[%c1_495, %c0_496, %c0_497, %c5_498, %c0_499] : memref<2x7x1x14x128xf32, #tpu.memory_space<vmem>>, vector<1x1x1x8x128xf32>
    %499 = vector.shape_cast %498 : vector<1x1x1x8x128xf32> to vector<1x8x128xf32>
    %500 = vector.broadcast %492 : f32 to vector<1x8x128xf32>
    %501 = arith.mulf %500, %499 : vector<1x8x128xf32>
    %502 = arith.addf %497, %501 : vector<1x8x128xf32>
    %c36 = arith.constant 36 : index
    %503 = memref.load %arg2[%c36] : memref<98xf32, #tpu.memory_space<smem>>
    %c85 = arith.constant 85 : index
    %504 = memref.load %arg2[%c85] : memref<98xf32, #tpu.memory_space<smem>>
    %c0_500 = arith.constant 0 : index
    %c1_501 = arith.constant 1 : index
    %c0_502 = arith.constant 0 : index
    %c5_503 = arith.constant 5 : index
    %c0_504 = arith.constant 0 : index
    %505 = vector.load %arg5[%c0_500, %c1_501, %c0_502, %c5_503, %c0_504] : memref<2x7x1x14x128xf32, #tpu.memory_space<vmem>>, vector<1x1x1x8x128xf32>
    %506 = vector.shape_cast %505 : vector<1x1x1x8x128xf32> to vector<1x8x128xf32>
    %507 = vector.broadcast %503 : f32 to vector<1x8x128xf32>
    %508 = arith.mulf %507, %506 : vector<1x8x128xf32>
    %509 = arith.addf %502, %508 : vector<1x8x128xf32>
    %c1_505 = arith.constant 1 : index
    %c1_506 = arith.constant 1 : index
    %c0_507 = arith.constant 0 : index
    %c5_508 = arith.constant 5 : index
    %c0_509 = arith.constant 0 : index
    %510 = vector.load %arg5[%c1_505, %c1_506, %c0_507, %c5_508, %c0_509] : memref<2x7x1x14x128xf32, #tpu.memory_space<vmem>>, vector<1x1x1x8x128xf32>
    %511 = vector.shape_cast %510 : vector<1x1x1x8x128xf32> to vector<1x8x128xf32>
    %512 = vector.broadcast %504 : f32 to vector<1x8x128xf32>
    %513 = arith.mulf %512, %511 : vector<1x8x128xf32>
    %514 = arith.addf %509, %513 : vector<1x8x128xf32>
    %c37 = arith.constant 37 : index
    %515 = memref.load %arg2[%c37] : memref<98xf32, #tpu.memory_space<smem>>
    %c86 = arith.constant 86 : index
    %516 = memref.load %arg2[%c86] : memref<98xf32, #tpu.memory_space<smem>>
    %c0_510 = arith.constant 0 : index
    %c2_511 = arith.constant 2 : index
    %c0_512 = arith.constant 0 : index
    %c5_513 = arith.constant 5 : index
    %c0_514 = arith.constant 0 : index
    %517 = vector.load %arg5[%c0_510, %c2_511, %c0_512, %c5_513, %c0_514] : memref<2x7x1x14x128xf32, #tpu.memory_space<vmem>>, vector<1x1x1x8x128xf32>
    %518 = vector.shape_cast %517 : vector<1x1x1x8x128xf32> to vector<1x8x128xf32>
    %519 = vector.broadcast %515 : f32 to vector<1x8x128xf32>
    %520 = arith.mulf %519, %518 : vector<1x8x128xf32>
    %521 = arith.addf %514, %520 : vector<1x8x128xf32>
    %c1_515 = arith.constant 1 : index
    %c2_516 = arith.constant 2 : index
    %c0_517 = arith.constant 0 : index
    %c5_518 = arith.constant 5 : index
    %c0_519 = arith.constant 0 : index
    %522 = vector.load %arg5[%c1_515, %c2_516, %c0_517, %c5_518, %c0_519] : memref<2x7x1x14x128xf32, #tpu.memory_space<vmem>>, vector<1x1x1x8x128xf32>
    %523 = vector.shape_cast %522 : vector<1x1x1x8x128xf32> to vector<1x8x128xf32>
    %524 = vector.broadcast %516 : f32 to vector<1x8x128xf32>
    %525 = arith.mulf %524, %523 : vector<1x8x128xf32>
    %526 = arith.addf %521, %525 : vector<1x8x128xf32>
    %c38 = arith.constant 38 : index
    %527 = memref.load %arg2[%c38] : memref<98xf32, #tpu.memory_space<smem>>
    %c87 = arith.constant 87 : index
    %528 = memref.load %arg2[%c87] : memref<98xf32, #tpu.memory_space<smem>>
    %c0_520 = arith.constant 0 : index
    %c3_521 = arith.constant 3 : index
    %c0_522 = arith.constant 0 : index
    %c5_523 = arith.constant 5 : index
    %c0_524 = arith.constant 0 : index
    %529 = vector.load %arg5[%c0_520, %c3_521, %c0_522, %c5_523, %c0_524] : memref<2x7x1x14x128xf32, #tpu.memory_space<vmem>>, vector<1x1x1x8x128xf32>
    %530 = vector.shape_cast %529 : vector<1x1x1x8x128xf32> to vector<1x8x128xf32>
    %531 = vector.broadcast %527 : f32 to vector<1x8x128xf32>
    %532 = arith.mulf %531, %530 : vector<1x8x128xf32>
    %533 = arith.addf %526, %532 : vector<1x8x128xf32>
    %c1_525 = arith.constant 1 : index
    %c3_526 = arith.constant 3 : index
    %c0_527 = arith.constant 0 : index
    %c5_528 = arith.constant 5 : index
    %c0_529 = arith.constant 0 : index
    %534 = vector.load %arg5[%c1_525, %c3_526, %c0_527, %c5_528, %c0_529] : memref<2x7x1x14x128xf32, #tpu.memory_space<vmem>>, vector<1x1x1x8x128xf32>
    %535 = vector.shape_cast %534 : vector<1x1x1x8x128xf32> to vector<1x8x128xf32>
    %536 = vector.broadcast %528 : f32 to vector<1x8x128xf32>
    %537 = arith.mulf %536, %535 : vector<1x8x128xf32>
    %538 = arith.addf %533, %537 : vector<1x8x128xf32>
    %c39 = arith.constant 39 : index
    %539 = memref.load %arg2[%c39] : memref<98xf32, #tpu.memory_space<smem>>
    %c88 = arith.constant 88 : index
    %540 = memref.load %arg2[%c88] : memref<98xf32, #tpu.memory_space<smem>>
    %c0_530 = arith.constant 0 : index
    %c4_531 = arith.constant 4 : index
    %c0_532 = arith.constant 0 : index
    %c5_533 = arith.constant 5 : index
    %c0_534 = arith.constant 0 : index
    %541 = vector.load %arg5[%c0_530, %c4_531, %c0_532, %c5_533, %c0_534] : memref<2x7x1x14x128xf32, #tpu.memory_space<vmem>>, vector<1x1x1x8x128xf32>
    %542 = vector.shape_cast %541 : vector<1x1x1x8x128xf32> to vector<1x8x128xf32>
    %543 = vector.broadcast %539 : f32 to vector<1x8x128xf32>
    %544 = arith.mulf %543, %542 : vector<1x8x128xf32>
    %545 = arith.addf %538, %544 : vector<1x8x128xf32>
    %c1_535 = arith.constant 1 : index
    %c4_536 = arith.constant 4 : index
    %c0_537 = arith.constant 0 : index
    %c5_538 = arith.constant 5 : index
    %c0_539 = arith.constant 0 : index
    %546 = vector.load %arg5[%c1_535, %c4_536, %c0_537, %c5_538, %c0_539] : memref<2x7x1x14x128xf32, #tpu.memory_space<vmem>>, vector<1x1x1x8x128xf32>
    %547 = vector.shape_cast %546 : vector<1x1x1x8x128xf32> to vector<1x8x128xf32>
    %548 = vector.broadcast %540 : f32 to vector<1x8x128xf32>
    %549 = arith.mulf %548, %547 : vector<1x8x128xf32>
    %550 = arith.addf %545, %549 : vector<1x8x128xf32>
    %c40 = arith.constant 40 : index
    %551 = memref.load %arg2[%c40] : memref<98xf32, #tpu.memory_space<smem>>
    %c89 = arith.constant 89 : index
    %552 = memref.load %arg2[%c89] : memref<98xf32, #tpu.memory_space<smem>>
    %c0_540 = arith.constant 0 : index
    %c5_541 = arith.constant 5 : index
    %c0_542 = arith.constant 0 : index
    %c5_543 = arith.constant 5 : index
    %c0_544 = arith.constant 0 : index
    %553 = vector.load %arg5[%c0_540, %c5_541, %c0_542, %c5_543, %c0_544] : memref<2x7x1x14x128xf32, #tpu.memory_space<vmem>>, vector<1x1x1x8x128xf32>
    %554 = vector.shape_cast %553 : vector<1x1x1x8x128xf32> to vector<1x8x128xf32>
    %555 = vector.broadcast %551 : f32 to vector<1x8x128xf32>
    %556 = arith.mulf %555, %554 : vector<1x8x128xf32>
    %557 = arith.addf %550, %556 : vector<1x8x128xf32>
    %c1_545 = arith.constant 1 : index
    %c5_546 = arith.constant 5 : index
    %c0_547 = arith.constant 0 : index
    %c5_548 = arith.constant 5 : index
    %c0_549 = arith.constant 0 : index
    %558 = vector.load %arg5[%c1_545, %c5_546, %c0_547, %c5_548, %c0_549] : memref<2x7x1x14x128xf32, #tpu.memory_space<vmem>>, vector<1x1x1x8x128xf32>
    %559 = vector.shape_cast %558 : vector<1x1x1x8x128xf32> to vector<1x8x128xf32>
    %560 = vector.broadcast %552 : f32 to vector<1x8x128xf32>
    %561 = arith.mulf %560, %559 : vector<1x8x128xf32>
    %562 = arith.addf %557, %561 : vector<1x8x128xf32>
    %c41 = arith.constant 41 : index
    %563 = memref.load %arg2[%c41] : memref<98xf32, #tpu.memory_space<smem>>
    %c90 = arith.constant 90 : index
    %564 = memref.load %arg2[%c90] : memref<98xf32, #tpu.memory_space<smem>>
    %c0_550 = arith.constant 0 : index
    %c6_551 = arith.constant 6 : index
    %c0_552 = arith.constant 0 : index
    %c5_553 = arith.constant 5 : index
    %c0_554 = arith.constant 0 : index
    %565 = vector.load %arg5[%c0_550, %c6_551, %c0_552, %c5_553, %c0_554] : memref<2x7x1x14x128xf32, #tpu.memory_space<vmem>>, vector<1x1x1x8x128xf32>
    %566 = vector.shape_cast %565 : vector<1x1x1x8x128xf32> to vector<1x8x128xf32>
    %567 = vector.broadcast %563 : f32 to vector<1x8x128xf32>
    %568 = arith.mulf %567, %566 : vector<1x8x128xf32>
    %569 = arith.addf %562, %568 : vector<1x8x128xf32>
    %c1_555 = arith.constant 1 : index
    %c6_556 = arith.constant 6 : index
    %c0_557 = arith.constant 0 : index
    %c5_558 = arith.constant 5 : index
    %c0_559 = arith.constant 0 : index
    %570 = vector.load %arg5[%c1_555, %c6_556, %c0_557, %c5_558, %c0_559] : memref<2x7x1x14x128xf32, #tpu.memory_space<vmem>>, vector<1x1x1x8x128xf32>
    %571 = vector.shape_cast %570 : vector<1x1x1x8x128xf32> to vector<1x8x128xf32>
    %572 = vector.broadcast %564 : f32 to vector<1x8x128xf32>
    %573 = arith.mulf %572, %571 : vector<1x8x128xf32>
    %574 = arith.addf %569, %573 : vector<1x8x128xf32>
    %c42 = arith.constant 42 : index
    %575 = memref.load %arg2[%c42] : memref<98xf32, #tpu.memory_space<smem>>
    %c91 = arith.constant 91 : index
    %576 = memref.load %arg2[%c91] : memref<98xf32, #tpu.memory_space<smem>>
    %c0_560 = arith.constant 0 : index
    %c0_561 = arith.constant 0 : index
    %c0_562 = arith.constant 0 : index
    %c6_563 = arith.constant 6 : index
    %c0_564 = arith.constant 0 : index
    %577 = vector.load %arg5[%c0_560, %c0_561, %c0_562, %c6_563, %c0_564] : memref<2x7x1x14x128xf32, #tpu.memory_space<vmem>>, vector<1x1x1x8x128xf32>
    %578 = vector.shape_cast %577 : vector<1x1x1x8x128xf32> to vector<1x8x128xf32>
    %579 = vector.broadcast %575 : f32 to vector<1x8x128xf32>
    %580 = arith.mulf %579, %578 : vector<1x8x128xf32>
    %581 = arith.addf %574, %580 : vector<1x8x128xf32>
    %c1_565 = arith.constant 1 : index
    %c0_566 = arith.constant 0 : index
    %c0_567 = arith.constant 0 : index
    %c6_568 = arith.constant 6 : index
    %c0_569 = arith.constant 0 : index
    %582 = vector.load %arg5[%c1_565, %c0_566, %c0_567, %c6_568, %c0_569] : memref<2x7x1x14x128xf32, #tpu.memory_space<vmem>>, vector<1x1x1x8x128xf32>
    %583 = vector.shape_cast %582 : vector<1x1x1x8x128xf32> to vector<1x8x128xf32>
    %584 = vector.broadcast %576 : f32 to vector<1x8x128xf32>
    %585 = arith.mulf %584, %583 : vector<1x8x128xf32>
    %586 = arith.addf %581, %585 : vector<1x8x128xf32>
    %c43 = arith.constant 43 : index
    %587 = memref.load %arg2[%c43] : memref<98xf32, #tpu.memory_space<smem>>
    %c92 = arith.constant 92 : index
    %588 = memref.load %arg2[%c92] : memref<98xf32, #tpu.memory_space<smem>>
    %c0_570 = arith.constant 0 : index
    %c1_571 = arith.constant 1 : index
    %c0_572 = arith.constant 0 : index
    %c6_573 = arith.constant 6 : index
    %c0_574 = arith.constant 0 : index
    %589 = vector.load %arg5[%c0_570, %c1_571, %c0_572, %c6_573, %c0_574] : memref<2x7x1x14x128xf32, #tpu.memory_space<vmem>>, vector<1x1x1x8x128xf32>
    %590 = vector.shape_cast %589 : vector<1x1x1x8x128xf32> to vector<1x8x128xf32>
    %591 = vector.broadcast %587 : f32 to vector<1x8x128xf32>
    %592 = arith.mulf %591, %590 : vector<1x8x128xf32>
    %593 = arith.addf %586, %592 : vector<1x8x128xf32>
    %c1_575 = arith.constant 1 : index
    %c1_576 = arith.constant 1 : index
    %c0_577 = arith.constant 0 : index
    %c6_578 = arith.constant 6 : index
    %c0_579 = arith.constant 0 : index
    %594 = vector.load %arg5[%c1_575, %c1_576, %c0_577, %c6_578, %c0_579] : memref<2x7x1x14x128xf32, #tpu.memory_space<vmem>>, vector<1x1x1x8x128xf32>
    %595 = vector.shape_cast %594 : vector<1x1x1x8x128xf32> to vector<1x8x128xf32>
    %596 = vector.broadcast %588 : f32 to vector<1x8x128xf32>
    %597 = arith.mulf %596, %595 : vector<1x8x128xf32>
    %598 = arith.addf %593, %597 : vector<1x8x128xf32>
    %c44 = arith.constant 44 : index
    %599 = memref.load %arg2[%c44] : memref<98xf32, #tpu.memory_space<smem>>
    %c93 = arith.constant 93 : index
    %600 = memref.load %arg2[%c93] : memref<98xf32, #tpu.memory_space<smem>>
    %c0_580 = arith.constant 0 : index
    %c2_581 = arith.constant 2 : index
    %c0_582 = arith.constant 0 : index
    %c6_583 = arith.constant 6 : index
    %c0_584 = arith.constant 0 : index
    %601 = vector.load %arg5[%c0_580, %c2_581, %c0_582, %c6_583, %c0_584] : memref<2x7x1x14x128xf32, #tpu.memory_space<vmem>>, vector<1x1x1x8x128xf32>
    %602 = vector.shape_cast %601 : vector<1x1x1x8x128xf32> to vector<1x8x128xf32>
    %603 = vector.broadcast %599 : f32 to vector<1x8x128xf32>
    %604 = arith.mulf %603, %602 : vector<1x8x128xf32>
    %605 = arith.addf %598, %604 : vector<1x8x128xf32>
    %c1_585 = arith.constant 1 : index
    %c2_586 = arith.constant 2 : index
    %c0_587 = arith.constant 0 : index
    %c6_588 = arith.constant 6 : index
    %c0_589 = arith.constant 0 : index
    %606 = vector.load %arg5[%c1_585, %c2_586, %c0_587, %c6_588, %c0_589] : memref<2x7x1x14x128xf32, #tpu.memory_space<vmem>>, vector<1x1x1x8x128xf32>
    %607 = vector.shape_cast %606 : vector<1x1x1x8x128xf32> to vector<1x8x128xf32>
    %608 = vector.broadcast %600 : f32 to vector<1x8x128xf32>
    %609 = arith.mulf %608, %607 : vector<1x8x128xf32>
    %610 = arith.addf %605, %609 : vector<1x8x128xf32>
    %c45 = arith.constant 45 : index
    %611 = memref.load %arg2[%c45] : memref<98xf32, #tpu.memory_space<smem>>
    %c94 = arith.constant 94 : index
    %612 = memref.load %arg2[%c94] : memref<98xf32, #tpu.memory_space<smem>>
    %c0_590 = arith.constant 0 : index
    %c3_591 = arith.constant 3 : index
    %c0_592 = arith.constant 0 : index
    %c6_593 = arith.constant 6 : index
    %c0_594 = arith.constant 0 : index
    %613 = vector.load %arg5[%c0_590, %c3_591, %c0_592, %c6_593, %c0_594] : memref<2x7x1x14x128xf32, #tpu.memory_space<vmem>>, vector<1x1x1x8x128xf32>
    %614 = vector.shape_cast %613 : vector<1x1x1x8x128xf32> to vector<1x8x128xf32>
    %615 = vector.broadcast %611 : f32 to vector<1x8x128xf32>
    %616 = arith.mulf %615, %614 : vector<1x8x128xf32>
    %617 = arith.addf %610, %616 : vector<1x8x128xf32>
    %c1_595 = arith.constant 1 : index
    %c3_596 = arith.constant 3 : index
    %c0_597 = arith.constant 0 : index
    %c6_598 = arith.constant 6 : index
    %c0_599 = arith.constant 0 : index
    %618 = vector.load %arg5[%c1_595, %c3_596, %c0_597, %c6_598, %c0_599] : memref<2x7x1x14x128xf32, #tpu.memory_space<vmem>>, vector<1x1x1x8x128xf32>
    %619 = vector.shape_cast %618 : vector<1x1x1x8x128xf32> to vector<1x8x128xf32>
    %620 = vector.broadcast %612 : f32 to vector<1x8x128xf32>
    %621 = arith.mulf %620, %619 : vector<1x8x128xf32>
    %622 = arith.addf %617, %621 : vector<1x8x128xf32>
    %c46 = arith.constant 46 : index
    %623 = memref.load %arg2[%c46] : memref<98xf32, #tpu.memory_space<smem>>
    %c95 = arith.constant 95 : index
    %624 = memref.load %arg2[%c95] : memref<98xf32, #tpu.memory_space<smem>>
    %c0_600 = arith.constant 0 : index
    %c4_601 = arith.constant 4 : index
    %c0_602 = arith.constant 0 : index
    %c6_603 = arith.constant 6 : index
    %c0_604 = arith.constant 0 : index
    %625 = vector.load %arg5[%c0_600, %c4_601, %c0_602, %c6_603, %c0_604] : memref<2x7x1x14x128xf32, #tpu.memory_space<vmem>>, vector<1x1x1x8x128xf32>
    %626 = vector.shape_cast %625 : vector<1x1x1x8x128xf32> to vector<1x8x128xf32>
    %627 = vector.broadcast %623 : f32 to vector<1x8x128xf32>
    %628 = arith.mulf %627, %626 : vector<1x8x128xf32>
    %629 = arith.addf %622, %628 : vector<1x8x128xf32>
    %c1_605 = arith.constant 1 : index
    %c4_606 = arith.constant 4 : index
    %c0_607 = arith.constant 0 : index
    %c6_608 = arith.constant 6 : index
    %c0_609 = arith.constant 0 : index
    %630 = vector.load %arg5[%c1_605, %c4_606, %c0_607, %c6_608, %c0_609] : memref<2x7x1x14x128xf32, #tpu.memory_space<vmem>>, vector<1x1x1x8x128xf32>
    %631 = vector.shape_cast %630 : vector<1x1x1x8x128xf32> to vector<1x8x128xf32>
    %632 = vector.broadcast %624 : f32 to vector<1x8x128xf32>
    %633 = arith.mulf %632, %631 : vector<1x8x128xf32>
    %634 = arith.addf %629, %633 : vector<1x8x128xf32>
    %c47 = arith.constant 47 : index
    %635 = memref.load %arg2[%c47] : memref<98xf32, #tpu.memory_space<smem>>
    %c96 = arith.constant 96 : index
    %636 = memref.load %arg2[%c96] : memref<98xf32, #tpu.memory_space<smem>>
    %c0_610 = arith.constant 0 : index
    %c5_611 = arith.constant 5 : index
    %c0_612 = arith.constant 0 : index
    %c6_613 = arith.constant 6 : index
    %c0_614 = arith.constant 0 : index
    %637 = vector.load %arg5[%c0_610, %c5_611, %c0_612, %c6_613, %c0_614] : memref<2x7x1x14x128xf32, #tpu.memory_space<vmem>>, vector<1x1x1x8x128xf32>
    %638 = vector.shape_cast %637 : vector<1x1x1x8x128xf32> to vector<1x8x128xf32>
    %639 = vector.broadcast %635 : f32 to vector<1x8x128xf32>
    %640 = arith.mulf %639, %638 : vector<1x8x128xf32>
    %641 = arith.addf %634, %640 : vector<1x8x128xf32>
    %c1_615 = arith.constant 1 : index
    %c5_616 = arith.constant 5 : index
    %c0_617 = arith.constant 0 : index
    %c6_618 = arith.constant 6 : index
    %c0_619 = arith.constant 0 : index
    %642 = vector.load %arg5[%c1_615, %c5_616, %c0_617, %c6_618, %c0_619] : memref<2x7x1x14x128xf32, #tpu.memory_space<vmem>>, vector<1x1x1x8x128xf32>
    %643 = vector.shape_cast %642 : vector<1x1x1x8x128xf32> to vector<1x8x128xf32>
    %644 = vector.broadcast %636 : f32 to vector<1x8x128xf32>
    %645 = arith.mulf %644, %643 : vector<1x8x128xf32>
    %646 = arith.addf %641, %645 : vector<1x8x128xf32>
    %c48 = arith.constant 48 : index
    %647 = memref.load %arg2[%c48] : memref<98xf32, #tpu.memory_space<smem>>
    %c97 = arith.constant 97 : index
    %648 = memref.load %arg2[%c97] : memref<98xf32, #tpu.memory_space<smem>>
    %c0_620 = arith.constant 0 : index
    %c6_621 = arith.constant 6 : index
    %c0_622 = arith.constant 0 : index
    %c6_623 = arith.constant 6 : index
    %c0_624 = arith.constant 0 : index
    %649 = vector.load %arg5[%c0_620, %c6_621, %c0_622, %c6_623, %c0_624] : memref<2x7x1x14x128xf32, #tpu.memory_space<vmem>>, vector<1x1x1x8x128xf32>
    %650 = vector.shape_cast %649 : vector<1x1x1x8x128xf32> to vector<1x8x128xf32>
    %651 = vector.broadcast %647 : f32 to vector<1x8x128xf32>
    %652 = arith.mulf %651, %650 : vector<1x8x128xf32>
    %653 = arith.addf %646, %652 : vector<1x8x128xf32>
    %c1_625 = arith.constant 1 : index
    %c6_626 = arith.constant 6 : index
    %c0_627 = arith.constant 0 : index
    %c6_628 = arith.constant 6 : index
    %c0_629 = arith.constant 0 : index
    %654 = vector.load %arg5[%c1_625, %c6_626, %c0_627, %c6_628, %c0_629] : memref<2x7x1x14x128xf32, #tpu.memory_space<vmem>>, vector<1x1x1x8x128xf32>
    %655 = vector.shape_cast %654 : vector<1x1x1x8x128xf32> to vector<1x8x128xf32>
    %656 = vector.broadcast %648 : f32 to vector<1x8x128xf32>
    %657 = arith.mulf %656, %655 : vector<1x8x128xf32>
    %658 = arith.addf %653, %657 : vector<1x8x128xf32>
    %cst_630 = arith.constant 0.000000e+00 : f32
    %659 = vector.broadcast %cst_630 : f32 to vector<1x8x128xf32>
    %660 = arith.subf %659, %658 : vector<1x8x128xf32>
    %661 = math.exp %660 : vector<1x8x128xf32>
    %cst_631 = arith.constant 1.000000e+00 : f32
    %662 = vector.broadcast %cst_631 : f32 to vector<1x8x128xf32>
    %663 = arith.addf %662, %661 : vector<1x8x128xf32>
    %664 = tpu.reciprocal %663 : vector<1x8x128xf32> -> vector<1x8x128xf32>
    %c0_632 = arith.constant 0 : index
    %c0_633 = arith.constant 0 : index
    %c0_634 = arith.constant 0 : index
    %665 = vector.load %arg4[%c0_632, %c0_633, %c0_634] : memref<1x8x128xf32, #tpu.memory_space<vmem>>, vector<1x8x128xf32>
    tpu.vector_store %arg4[%c0_632, %c0_633, %c0_634], %664 {strides = array<i32>} : memref<1x8x128xf32, #tpu.memory_space<vmem>>, vector<1x8x128xf32>,
    return
  }
  func.func @transform_0(%arg0: i32, %arg1: i32, %arg2: memref<98xf32, #tpu.memory_space<smem>>) -> (i32, i32, i32, i32, i32) {
    %c0_i32 = arith.constant 0 : i32
    %c0_i32_0 = arith.constant 0 : i32
    %c0_i32_1 = arith.constant 0 : i32
    %c0_i32_2 = arith.constant 0 : i32
    return %arg0, %c0_i32, %arg1, %c0_i32_0, %c0_i32_1 : i32, i32, i32, i32, i32
  }
  func.func @transform_1(%arg0: i32, %arg1: i32, %arg2: memref<98xf32, #tpu.memory_space<smem>>) -> (i32, i32, i32) {
    %c0_i32 = arith.constant 0 : i32
    %c0_i32_0 = arith.constant 0 : i32
    return %arg0, %arg1, %c0_i32 : i32, i32, i32
  }
}

</mosaic_0001>

<llo_original>
// kernel: tpu_custom_call.1
$region0: #{tpu_custom_call.1}
  #allocation0 [shape = 'u32[]', space=smem, size = 0x4, offset = 0x4, fixed_abs, tag = 'smem constant byte address 0x4 - core index']
  #allocation1 [shape = 'u32[144,128]{1,0:T(1,128)}', space=vmem, size = 0x12000, scoped, tag = 'internal scratch']
  #allocation2 [shape = 'f32[2,7,1,14,128]{4,3,2,1,0:T(8,128)}', space=vmem, size = 0x1c000, scoped, tag = 'scratch operand']
  #allocation3 [shape = 's32[1]{0}', space=sflag, size = 0x4, scoped, tag = 'scoped memory for tpu_custom_call.1']
  #allocation4 [shape = 'u8[512]{0}', space=smem, size = 0x200, scoped, tag = 'prefetched SMEM operand 0']
  %s0 = inlined_call_operand.vmem [shape: f32[98], index: 0, kind: input, shape index: {}]
  %s1 = inlined_call_operand.vmem [shape: f32[2,2,2,14,256], index: 1, kind: input, shape index: {}]
  %s2 = inlined_call_operand.hbm [shape: f32[2,16,128], index: 2, kind: output, shape index: {}]
  %s3 = sld [smem:[#allocation0]]
  $region60: #{tpu_custom_call.1} parent=0
    _
  %s5 = ssub.s32 1, %s3
  %s6 = scalar_select 0, %s5, %s3
  %s7 = sshll.u32 %s0, 4
  %s8 = int_to_ptr.vmem [resolvable:$true] %s7
  %10 = dma.vmem_to_smem %s8, 16, [#allocation4], [#allocation3]
  %11 = dma.done [#allocation3], 16
  %12 = sfence
  $region1: #{tpu_custom_call.1} parent=0
    #allocation5 [shape = 'u8[65536]{0}', space=vmem, size = 0x10000, scoped, tag = 'input window, operand 1']
    #allocation6 [shape = 'u8[8192]{0}', space=vmem, size = 0x2000, scoped, tag = 'output window, operand 0']
    #allocation7 [shape = 's32[2]{0}', space=sflag, size = 0x8, scoped, tag = 'scoped memory for tpu_custom_call.1']
    %13 = vsyncpa [#allocation7], 0
    %s14 = scalar_lea.sflag [#allocation7], 1
    %15 = vsyncpa %s14, 0
    loop: start=0, step=1, limit=6
    $region2: #{tpu_custom_call.1} parent=1 // loop_pre_header
      _
    $region3: #{tpu_custom_call.1} parent=1 // loop_header
      %s17 = sphi 0, %s21
      %p18 = scmp.ge.s32.totalorder %s17, 6
      %s24 = sphi 0, %s36
      %s25 = sphi 0, %s32
      %s26 = sphi 0, %s24
      %s27 = sphi 0, %s25
      %s28 = sphi 0, %s26
      %s29 = sphi 0, %s27
      %s41 = sphi 0, %s43
      %s44 = sphi 0, %s41
      %s45 = sphi 0, %s44
      %s61 = sphi 0, %s45
      %s69 = sphi 0, %s71
      %s72 = sphi 0, %s69
      %s73 = sphi 0, %s72
      %s89 = sphi 0, %s73
    $region4: #{tpu_custom_call.1} parent=1 // loop_header_branch
      %20 = sbr.rel (%p18) target = $region8
    $region5: #{tpu_custom_call.1} parent=1 // loop_body
      %s22 = ssub.s32 %s17, 1
      %s23 = ssub.s32 %s17, 2
      %s30 = sadd.s32 1, %s25
      %p31 = scmp.ge.s32.totalorder %s30, 2
      %s32 = scalar_select %p31, 0, %s30
      %s33 = sadd.s32 1, %s24
      %s34 = scalar_select %p31, %s33, %s24
      %p35 = scmp.ge.s32.totalorder %s34, 2
      %s36 = scalar_select %p35, 0, %s34
      %s37 = ssub.s32 %s24, %s36
      %s38 = ssub.s32 %s25, %s32
      %s39 = sor.u32 %s37, %s38
      %p40 = scmp.eq.s32.totalorder %s39, 0
      %s42 = sadd.s32 %s41, 1
      %s43 = scalar_select %p40, %s41, %s42
      %p46 = pneg %p40
      %p47 = scmp.eq.s32.totalorder %s17, 3
      %p48 = por %p46, %p47
      %p49 = scmp.ne.s32.totalorder %s41, %s44
      %p50 = scmp.eq.s32.totalorder %s17, 0
      %p51 = por %p49, %p50
      %p52 = scmp.ne.s32.totalorder %s41, %s44
      %p53 = scmp.eq.s32.totalorder %s22, 3
      %p54 = por %p52, %p53
      %p55 = scmp.ne.s32.totalorder %s44, %s45
      %p56 = scmp.eq.s32.totalorder %s22, 0
      %p57 = por %p55, %p56
      %p58 = scmp.ne.s32.totalorder %s44, %s45
      %p59 = scmp.eq.s32.totalorder %s23, 3
      %p60 = por %p58, %p59
      %p62 = scmp.ne.s32.totalorder %s45, %s61
      %p63 = scmp.eq.s32.totalorder %s23, 0
      %p64 = por %p62, %p63
      %s65 = ssub.s32 %s24, %s36
      %s66 = ssub.s32 %s25, %s32
      %s67 = sor.u32 %s65, %s66
      %p68 = scmp.eq.s32.totalorder %s67, 0
      %s70 = sadd.s32 %s69, 1
      %s71 = scalar_select %p68, %s69, %s70
      %p74 = pneg %p68
      %p75 = scmp.eq.s32.totalorder %s17, 3
      %p76 = por %p74, %p75
      %p77 = scmp.ne.s32.totalorder %s69, %s72
      %p78 = scmp.eq.s32.totalorder %s17, 0
      %p79 = por %p77, %p78
      %p80 = scmp.ne.s32.totalorder %s69, %s72
      %p81 = scmp.eq.s32.totalorder %s22, 3
      %p82 = por %p80, %p81
      %p83 = scmp.ne.s32.totalorder %s72, %s73
      %p84 = scmp.eq.s32.totalorder %s22, 0
      %p85 = por %p83, %p84
      %p86 = scmp.ne.s32.totalorder %s72, %s73
      %p87 = scmp.eq.s32.totalorder %s23, 3
      %p88 = por %p86, %p87
      %p90 = scmp.ne.s32.totalorder %s73, %s89
      %p91 = scmp.eq.s32.totalorder %s23, 0
      %p92 = por %p90, %p91
      %p93 = scmp.le.s32.totalorder 1, %s17
      %p94 = scmp.lt.s32.totalorder %s17, 5
      %p95 = pnand %p93, %p94
      %p96 = pneg %p95
      // Predicated region
      $region9: #{tpu_custom_call.1} parent=5 // pred_check
        _
      $region10: #{tpu_custom_call.1} parent=5 // pred_check_branch
        %98 = sbr.rel (%p95) target = $region12
      $region11: #{tpu_custom_call.1} parent=5 // pred_region
        %s99 = ssub.s32 %s17, 1
      $region12: #{tpu_custom_call.1} parent=5 // pred_fallthru
        _
      %p100 = scmp.lt.s32.totalorder %s17, 4
      // Predicated region
      $region13: #{tpu_custom_call.1} parent=5 // pred_check
        %p101 = pneg %p100
      $region14: #{tpu_custom_call.1} parent=5 // pred_check_branch
        %103 = sbr.rel (%p101) target = $region16
      $region15: #{tpu_custom_call.1} parent=5 // pred_region
        // Predicated region
        $region17: #{tpu_custom_call.1} parent=15 // pred_check
          %p104 = pneg %p51
        $region18: #{tpu_custom_call.1} parent=15 // pred_check_branch
          %106 = sbr.rel (%p104) target = $region20
        $region19: #{tpu_custom_call.1} parent=15 // pred_region
          %s107 = sand.u32 %s41, 1
          %s108 = sand.u32 %s41, 1
          %s109 = smul.addr %s108, 64
          %s110 = scalar_lea.vmem [#allocation5], %s109
          %s111 = smul.addr %s25, 4
          %s112 = smul.addr %s24, 16
          %s113 = sadd.s32 %s111, %s112
          %s114 = smul.addr %s113, 8
          %s115 = scalar_lea.vmem %s1, %s114
          // Predicated region
          $region21: #{tpu_custom_call.1} parent=19 // pred_check
            _
          $region22: #{tpu_custom_call.1} parent=19 // pred_check_branch
            %117 = sbr.rel (0) target = $region24
          $region23: #{tpu_custom_call.1} parent=19 // pred_region
            // Predicated region
            $region25: #{tpu_custom_call.1} parent=23 // pred_check
              _
            $region26: #{tpu_custom_call.1} parent=23 // pred_check_branch
              %119 = sbr.rel (0) target = $region28
            $region27: #{tpu_custom_call.1} parent=23 // pred_region
              loop: start=0, step=1, limit=1
              $region29: #{tpu_custom_call.1} parent=27 // loop_pre_header
                _
              $region30: #{tpu_custom_call.1} parent=27 // loop_header
                %s121 = sphi 0, %s125
                %p122 = scmp.ge.s32.totalorder %s121, 1
                %s126 = sphi %s115, %s115
                %s127 = sphi %s110, %s110
              $region31: #{tpu_custom_call.1} parent=27 // loop_header_branch
                %124 = sbr.rel (%p122) target = $region35
              $region32: #{tpu_custom_call.1} parent=27 // loop_body
                %v128 = vld [vmem:[%s126] sm:$0xff]
                %129 = vst [vmem:[%s127] sm:$0xff] %v128
                %v130 = vld [vmem:[%s126 + $0x8] sm:$0xff]
                %131 = vst [vmem:[%s127 + $0x8] sm:$0xff] %v130
                %v132 = vld [vmem:[%s126 + $0x10] sm:$0xff]
                %133 = vst [vmem:[%s127 + $0x10] sm:$0xff] %v132
                %v134 = vld [vmem:[%s126 + $0x18] sm:$0xff]
                %135 = vst [vmem:[%s127 + $0x18] sm:$0xff] %v134
                %v136 = vld [vmem:[%s126 + $0x40] sm:$0xff]
                %137 = vst [vmem:[%s127 + $0x20] sm:$0xff] %v136
                %v138 = vld [vmem:[%s126 + $0x48] sm:$0xff]
                %139 = vst [vmem:[%s127 + $0x28] sm:$0xff] %v138
                %v140 = vld [vmem:[%s126 + $0x50] sm:$0xff]
                %141 = vst [vmem:[%s127 + $0x30] sm:$0xff] %v140
                %v142 = vld [vmem:[%s126 + $0x58] sm:$0xff]
                %143 = vst [vmem:[%s127 + $0x38] sm:$0xff] %v142
              $region33: #{tpu_custom_call.1} parent=27 // loop_footer
                %s125 = sadd.s32 1, %s121
              $region34: #{tpu_custom_call.1} parent=27 // loop_footer_branch
                %120 = sbr.rel target = $region30
              $region35: #{tpu_custom_call.1} parent=27 // loop_exit
                _
            $region28: #{tpu_custom_call.1} parent=23 // pred_fallthru
              _
            // Predicated region
            $region36: #{tpu_custom_call.1} parent=23 // pred_check
              _
            $region37: #{tpu_custom_call.1} parent=23 // pred_check_branch
              %145 = sbr.rel target = $region39
            $region38: #{tpu_custom_call.1} parent=23 // pred_region
              _
            $region39: #{tpu_custom_call.1} parent=23 // pred_fallthru
              _
          $region24: #{tpu_custom_call.1} parent=19 // pred_fallthru
            _
          %146 = vnop
        $region20: #{tpu_custom_call.1} parent=15 // pred_fallthru
          _
      $region16: #{tpu_custom_call.1} parent=5 // pred_fallthru
        _
      %p147 = scmp.le.s32.totalorder 1, %s17
      %p148 = scmp.lt.s32.totalorder %s17, 5
      %p149 = pnand %p147, %p148
      %p150 = pneg %p149
      // Predicated region
      $region40: #{tpu_custom_call.1} parent=5 // pred_check
        _
      $region41: #{tpu_custom_call.1} parent=5 // pred_check_branch
        %152 = sbr.rel (%p149) target = $region43
      $region42: #{tpu_custom_call.1} parent=5 // pred_region
        %s153 = ssub.s32 %s17, 1
        %s154 = sand.u32 %s44, 1
        %s155 = sand.u32 %s44, 1
        %s156 = smul.addr %s155, 64
        %s157 = scalar_lea.vmem [#allocation5], %s156
        // Predicated region
        $region44: #{tpu_custom_call.1} parent=42 // pred_check
          %p158 = pneg %p57
        $region45: #{tpu_custom_call.1} parent=42 // pred_check_branch
          %160 = sbr.rel (%p158) target = $region47
        $region46: #{tpu_custom_call.1} parent=42 // pred_region
          _
        $region47: #{tpu_custom_call.1} parent=42 // pred_fallthru
          _
        %s161 = sand.u32 %s44, 1
        %s162 = sand.u32 %s44, 1
        %s163 = smul.addr %s162, 64
        %s164 = scalar_lea.vmem [#allocation5], %s163
        %p165 = pneg %p57
        %p166 = pneg %p54
        %p167 = pneg %p85
        %p168 = pneg %p82
        %s169 = sand.u32 %s72, 1
        %s170 = scalar_lea.sflag [#allocation7], %s169
        %s171 = sand.u32 %s72, 1
        %s172 = smul.addr %s171, 8
        %s173 = scalar_lea.vmem [#allocation6], %s172
        %v174 = vld [vmem:[%s157] sm:$0xff]
        %v175 = vld [vmem:[%s157 + $0x10] sm:$0x3f]
        %176 = vst [vmem:[#allocation2] sm:$0xff] %v174
        %177 = vst [vmem:[#allocation2 + $0x8] sm:$0x3f] %v175
        %v178 = vld [vmem:[%s157] sm:$0xff]
        %v179 = vld [vmem:[%s157 + $0x8] sm:$0xff]
        %v180 = vld [vmem:[%s157 + $0x10] sm:$0x3f]
        %v181 = vld [vmem:[%s157 + $0x18] sm:$0x3f]
        %186 = vrot.lane.b32.xlu0 %v178, 127
        %v187 = vpop.permute.xlu0 %186
        %188 = vrot.lane.b32.xlu0 %v179, 127
        %v189 = vpop.permute.xlu0 %188
        %190 = vrot.lane.b32.xlu0 %v180, 127
        %v191 = vpop.permute.xlu0 %190
        %192 = vrot.lane.b32.xlu0 %v181, 127
        %v193 = vpop.permute.xlu0 %192
        %vm194 = vcmask 1039360
        %v195 = vsel %vm194, %v187, %v189
        %v196 = vsel %vm194, %v191, %v193
        %s199 = scalar_lea.vmem [#allocation2], 16
        %200 = vst [vmem:[%s199] sm:$0xff] %v195
        %201 = vst [vmem:[%s199 + $0x8] sm:$0x3f] %v196
        %v202 = vld [vmem:[%s157] sm:$0xff]
        %v203 = vld [vmem:[%s157 + $0x8] sm:$0xff]
        %v204 = vld [vmem:[%s157 + $0x10] sm:$0x3f]
        %v205 = vld [vmem:[%s157 + $0x18] sm:$0x3f]
        %210 = vrot.lane.b32.xlu0 %v202, 126
        %v211 = vpop.permute.xlu0 %210
        %212 = vrot.lane.b32.xlu0 %v203, 126
        %v213 = vpop.permute.xlu0 %212
        %214 = vrot.lane.b32.xlu0 %v204, 126
        %v215 = vpop.permute.xlu0 %214
        %216 = vrot.lane.b32.xlu0 %v205, 126
        %v217 = vpop.permute.xlu0 %216
        %vm218 = vcmask 1031168
        %v219 = vsel %vm218, %v211, %v213
        %v220 = vsel %vm218, %v215, %v217
        %s223 = scalar_lea.vmem [#allocation2], 32
        %224 = vst [vmem:[%s223] sm:$0xff] %v219
        %225 = vst [vmem:[%s223 + $0x8] sm:$0x3f] %v220
        %v226 = vld [vmem:[%s157] sm:$0xff]
        %v227 = vld [vmem:[%s157 + $0x8] sm:$0xff]
        %v228 = vld [vmem:[%s157 + $0x10] sm:$0x3f]
        %v229 = vld [vmem:[%s157 + $0x18] sm:$0x3f]
        %234 = vrot.lane.b32.xlu0 %v226, 125
        %v235 = vpop.permute.xlu0 %234
        %236 = vrot.lane.b32.xlu0 %v227, 125
        %v237 = vpop.permute.xlu0 %236
        %238 = vrot.lane.b32.xlu0 %v228, 125
        %v239 = vpop.permute.xlu0 %238
        %240 = vrot.lane.b32.xlu0 %v229, 125
        %v241 = vpop.permute.xlu0 %240
        %vm242 = vcmask 1022976
        %v243 = vsel %vm242, %v235, %v237
        %v244 = vsel %vm242, %v239, %v241
        %s247 = scalar_lea.vmem [#allocation2], 48
        %248 = vst [vmem:[%s247] sm:$0xff] %v243
        %249 = vst [vmem:[%s247 + $0x8] sm:$0x3f] %v244
        %v250 = vld [vmem:[%s157] sm:$0xff]
        %v251 = vld [vmem:[%s157 + $0x8] sm:$0xff]
        %v252 = vld [vmem:[%s157 + $0x10] sm:$0x3f]
        %v253 = vld [vmem:[%s157 + $0x18] sm:$0x3f]
        %258 = vrot.lane.b32.xlu0 %v250, 124
        %v259 = vpop.permute.xlu0 %258
        %260 = vrot.lane.b32.xlu0 %v251, 124
        %v261 = vpop.permute.xlu0 %260
        %262 = vrot.lane.b32.xlu0 %v252, 124
        %v263 = vpop.permute.xlu0 %262
        %264 = vrot.lane.b32.xlu0 %v253, 124
        %v265 = vpop.permute.xlu0 %264
        %vm266 = vcmask 1014784
        %v267 = vsel %vm266, %v259, %v261
        %v268 = vsel %vm266, %v263, %v265
        %s271 = scalar_lea.vmem [#allocation2], 64
        %272 = vst [vmem:[%s271] sm:$0xff] %v267
        %273 = vst [vmem:[%s271 + $0x8] sm:$0x3f] %v268
        %v274 = vld [vmem:[%s157] sm:$0xff]
        %v275 = vld [vmem:[%s157 + $0x8] sm:$0xff]
        %v276 = vld [vmem:[%s157 + $0x10] sm:$0x3f]
        %v277 = vld [vmem:[%s157 + $0x18] sm:$0x3f]
        %282 = vrot.lane.b32.xlu0 %v274, 123
        %v283 = vpop.permute.xlu0 %282
        %284 = vrot.lane.b32.xlu0 %v275, 123
        %v285 = vpop.permute.xlu0 %284
        %286 = vrot.lane.b32.xlu0 %v276, 123
        %v287 = vpop.permute.xlu0 %286
        %288 = vrot.lane.b32.xlu0 %v277, 123
        %v289 = vpop.permute.xlu0 %288
        %vm290 = vcmask 1006592
        %v291 = vsel %vm290, %v283, %v285
        %v292 = vsel %vm290, %v287, %v289
        %s295 = scalar_lea.vmem [#allocation2], 80
        %296 = vst [vmem:[%s295] sm:$0xff] %v291
        %297 = vst [vmem:[%s295 + $0x8] sm:$0x3f] %v292
        %v298 = vld [vmem:[%s157] sm:$0xff]
        %v299 = vld [vmem:[%s157 + $0x8] sm:$0xff]
        %v300 = vld [vmem:[%s157 + $0x10] sm:$0x3f]
        %v301 = vld [vmem:[%s157 + $0x18] sm:$0x3f]
        %306 = vrot.lane.b32.xlu0 %v298, 122
        %v307 = vpop.permute.xlu0 %306
        %308 = vrot.lane.b32.xlu0 %v299, 122
        %v309 = vpop.permute.xlu0 %308
        %310 = vrot.lane.b32.xlu0 %v300, 122
        %v311 = vpop.permute.xlu0 %310
        %312 = vrot.lane.b32.xlu0 %v301, 122
        %v313 = vpop.permute.xlu0 %312
        %vm314 = vcmask 998400
        %v315 = vsel %vm314, %v307, %v309
        %v316 = vsel %vm314, %v311, %v313
        %s319 = scalar_lea.vmem [#allocation2], 96
        %320 = vst [vmem:[%s319] sm:$0xff] %v315
        %321 = vst [vmem:[%s319 + $0x8] sm:$0x3f] %v316
        %s322 = scalar_lea.vmem %s157, 32 [#allocation5]
        %v323 = vld [vmem:[%s322] sm:$0xff]
        %v324 = vld [vmem:[%s322 + $0x10] sm:$0x3f]
        %s325 = scalar_lea.vmem [#allocation2], 112
        %326 = vst [vmem:[%s325] sm:$0xff] %v323
        %327 = vst [vmem:[%s325 + $0x8] sm:$0x3f] %v324
        %v328 = vld [vmem:[%s322] sm:$0xff]
        %v329 = vld [vmem:[%s322 + $0x8] sm:$0xff]
        %v330 = vld [vmem:[%s322 + $0x10] sm:$0x3f]
        %v331 = vld [vmem:[%s322 + $0x18] sm:$0x3f]
        %336 = vrot.lane.b32.xlu0 %v328, 127
        %v337 = vpop.permute.xlu0 %336
        %338 = vrot.lane.b32.xlu0 %v329, 127
        %v339 = vpop.permute.xlu0 %338
        %340 = vrot.lane.b32.xlu0 %v330, 127
        %v341 = vpop.permute.xlu0 %340
        %342 = vrot.lane.b32.xlu0 %v331, 127
        %v343 = vpop.permute.xlu0 %342
        %v344 = vsel %vm194, %v337, %v339
        %v345 = vsel %vm194, %v341, %v343
        %s348 = scalar_lea.vmem [#allocation2], 128
        %349 = vst [vmem:[%s348] sm:$0xff] %v344
        %350 = vst [vmem:[%s348 + $0x8] sm:$0x3f] %v345
        %v351 = vld [vmem:[%s322] sm:$0xff]
        %v352 = vld [vmem:[%s322 + $0x8] sm:$0xff]
        %v353 = vld [vmem:[%s322 + $0x10] sm:$0x3f]
        %v354 = vld [vmem:[%s322 + $0x18] sm:$0x3f]
        %359 = vrot.lane.b32.xlu0 %v351, 126
        %v360 = vpop.permute.xlu0 %359
        %361 = vrot.lane.b32.xlu0 %v352, 126
        %v362 = vpop.permute.xlu0 %361
        %363 = vrot.lane.b32.xlu0 %v353, 126
        %v364 = vpop.permute.xlu0 %363
        %365 = vrot.lane.b32.xlu0 %v354, 126
        %v366 = vpop.permute.xlu0 %365
        %v367 = vsel %vm218, %v360, %v362
        %v368 = vsel %vm218, %v364, %v366
        %s371 = scalar_lea.vmem [#allocation2], 144
        %372 = vst [vmem:[%s371] sm:$0xff] %v367
        %373 = vst [vmem:[%s371 + $0x8] sm:$0x3f] %v368
        %v374 = vld [vmem:[%s322] sm:$0xff]
        %v375 = vld [vmem:[%s322 + $0x8] sm:$0xff]
        %v376 = vld [vmem:[%s322 + $0x10] sm:$0x3f]
        %v377 = vld [vmem:[%s322 + $0x18] sm:$0x3f]
        %382 = vrot.lane.b32.xlu0 %v374, 125
        %v383 = vpop.permute.xlu0 %382
        %384 = vrot.lane.b32.xlu0 %v375, 125
        %v385 = vpop.permute.xlu0 %384
        %386 = vrot.lane.b32.xlu0 %v376, 125
        %v387 = vpop.permute.xlu0 %386
        %388 = vrot.lane.b32.xlu0 %v377, 125
        %v389 = vpop.permute.xlu0 %388
        %v390 = vsel %vm242, %v383, %v385
        %v391 = vsel %vm242, %v387, %v389
        %s394 = scalar_lea.vmem [#allocation2], 160
        %395 = vst [vmem:[%s394] sm:$0xff] %v390
        %396 = vst [vmem:[%s394 + $0x8] sm:$0x3f] %v391
        %v397 = vld [vmem:[%s322] sm:$0xff]
        %v398 = vld [vmem:[%s322 + $0x8] sm:$0xff]
        %v399 = vld [vmem:[%s322 + $0x10] sm:$0x3f]
        %v400 = vld [vmem:[%s322 + $0x18] sm:$0x3f]
        %405 = vrot.lane.b32.xlu0 %v397, 124
        %v406 = vpop.permute.xlu0 %405
        %407 = vrot.lane.b32.xlu0 %v398, 124
        %v408 = vpop.permute.xlu0 %407
        %409 = vrot.lane.b32.xlu0 %v399, 124
        %v410 = vpop.permute.xlu0 %409
        %411 = vrot.lane.b32.xlu0 %v400, 124
        %v412 = vpop.permute.xlu0 %411
        %v413 = vsel %vm266, %v406, %v408
        %v414 = vsel %vm266, %v410, %v412
        %s417 = scalar_lea.vmem [#allocation2], 176
        %418 = vst [vmem:[%s417] sm:$0xff] %v413
        %419 = vst [vmem:[%s417 + $0x8] sm:$0x3f] %v414
        %v420 = vld [vmem:[%s322] sm:$0xff]
        %v421 = vld [vmem:[%s322 + $0x8] sm:$0xff]
        %v422 = vld [vmem:[%s322 + $0x10] sm:$0x3f]
        %v423 = vld [vmem:[%s322 + $0x18] sm:$0x3f]
        %428 = vrot.lane.b32.xlu0 %v420, 123
        %v429 = vpop.permute.xlu0 %428
        %430 = vrot.lane.b32.xlu0 %v421, 123
        %v431 = vpop.permute.xlu0 %430
        %432 = vrot.lane.b32.xlu0 %v422, 123
        %v433 = vpop.permute.xlu0 %432
        %434 = vrot.lane.b32.xlu0 %v423, 123
        %v435 = vpop.permute.xlu0 %434
        %v436 = vsel %vm290, %v429, %v431
        %v437 = vsel %vm290, %v433, %v435
        %s440 = scalar_lea.vmem [#allocation2], 192
        %441 = vst [vmem:[%s440] sm:$0xff] %v436
        %442 = vst [vmem:[%s440 + $0x8] sm:$0x3f] %v437
        %v443 = vld [vmem:[%s322] sm:$0xff]
        %v444 = vld [vmem:[%s322 + $0x8] sm:$0xff]
        %v445 = vld [vmem:[%s322 + $0x10] sm:$0x3f]
        %v446 = vld [vmem:[%s322 + $0x18] sm:$0x3f]
        %451 = vrot.lane.b32.xlu0 %v443, 122
        %v452 = vpop.permute.xlu0 %451
        %453 = vrot.lane.b32.xlu0 %v444, 122
        %v454 = vpop.permute.xlu0 %453
        %455 = vrot.lane.b32.xlu0 %v445, 122
        %v456 = vpop.permute.xlu0 %455
        %457 = vrot.lane.b32.xlu0 %v446, 122
        %v458 = vpop.permute.xlu0 %457
        %v459 = vsel %vm314, %v452, %v454
        %v460 = vsel %vm314, %v456, %v458
        %s463 = scalar_lea.vmem [#allocation2], 208
        %464 = vst [vmem:[%s463] sm:$0xff] %v459
        %465 = vst [vmem:[%s463 + $0x8] sm:$0x3f] %v460
        %s466 = sld [smem:[#allocation4]]
        %s467 = sld [smem:[#allocation4 + $0x31]]
        %v468 = vld [vmem:[#allocation2] sm:$0xff]
        %v469 = vstv %s466
        %v470 = vmul.f32 %v469, %v468
        %v471 = vadd.f32 %v470, 0.0
        %v472 = vld [vmem:[%s325] sm:$0xff]
        %v473 = vstv %s467
        %v474 = vmul.f32 %v473, %v472
        %v475 = vadd.f32 %v471, %v474
        %s476 = sld [smem:[#allocation4 + $0x1]]
        %s477 = sld [smem:[#allocation4 + $0x32]]
        %v478 = vld [vmem:[%s199] sm:$0xff]
        %v479 = vstv %s476
        %v480 = vmul.f32 %v479, %v478
        %v481 = vadd.f32 %v475, %v480
        %v482 = vld [vmem:[%s348] sm:$0xff]
        %v483 = vstv %s477
        %v484 = vmul.f32 %v483, %v482
        %v485 = vadd.f32 %v481, %v484
        %s486 = sld [smem:[#allocation4 + $0x2]]
        %s487 = sld [smem:[#allocation4 + $0x33]]
        %v488 = vld [vmem:[%s223] sm:$0xff]
        %v489 = vstv %s486
        %v490 = vmul.f32 %v489, %v488
        %v491 = vadd.f32 %v485, %v490
        %v492 = vld [vmem:[%s371] sm:$0xff]
        %v493 = vstv %s487
        %v494 = vmul.f32 %v493, %v492
        %v495 = vadd.f32 %v491, %v494
        %s496 = sld [smem:[#allocation4 + $0x3]]
        %s497 = sld [smem:[#allocation4 + $0x34]]
        %v498 = vld [vmem:[%s247] sm:$0xff]
        %v499 = vstv %s496
        %v500 = vmul.f32 %v499, %v498
        %v501 = vadd.f32 %v495, %v500
        %v502 = vld [vmem:[%s394] sm:$0xff]
        %v503 = vstv %s497
        %v504 = vmul.f32 %v503, %v502
        %v505 = vadd.f32 %v501, %v504
        %s506 = sld [smem:[#allocation4 + $0x4]]
        %s507 = sld [smem:[#allocation4 + $0x35]]
        %v508 = vld [vmem:[%s271] sm:$0xff]
        %v509 = vstv %s506
        %v510 = vmul.f32 %v509, %v508
        %v511 = vadd.f32 %v505, %v510
        %v512 = vld [vmem:[%s417] sm:$0xff]
        %v513 = vstv %s507
        %v514 = vmul.f32 %v513, %v512
        %v515 = vadd.f32 %v511, %v514
        %s516 = sld [smem:[#allocation4 + $0x5]]
        %s517 = sld [smem:[#allocation4 + $0x36]]
        %v518 = vld [vmem:[%s295] sm:$0xff]
        %v519 = vstv %s516
        %v520 = vmul.f32 %v519, %v518
        %v521 = vadd.f32 %v515, %v520
        %v522 = vld [vmem:[%s440] sm:$0xff]
        %v523 = vstv %s517
        %v524 = vmul.f32 %v523, %v522
        %v525 = vadd.f32 %v521, %v524
        %s526 = sld [smem:[#allocation4 + $0x6]]
        %s527 = sld [smem:[#allocation4 + $0x37]]
        %v528 = vld [vmem:[%s319] sm:$0xff]
        %v529 = vstv %s526
        %v530 = vmul.f32 %v529, %v528
        %v531 = vadd.f32 %v525, %v530
        %v532 = vld [vmem:[%s463] sm:$0xff]
        %v533 = vstv %s527
        %v534 = vmul.f32 %v533, %v532
        %v535 = vadd.f32 %v531, %v534
        %s536 = sld [smem:[#allocation4 + $0x7]]
        %s537 = sld [smem:[#allocation4 + $0x38]]
        %v538 = vld [vmem:[#allocation2 + $0x1] sm:$0xff]
        %v539 = vstv %s536
        %v540 = vmul.f32 %v539, %v538
        %v541 = vadd.f32 %v535, %v540
        %v542 = vld [vmem:[%s325 + $0x1] sm:$0xff]
        %v543 = vstv %s537
        %v544 = vmul.f32 %v543, %v542
        %v545 = vadd.f32 %v541, %v544
        %s546 = sld [smem:[#allocation4 + $0x8]]
        %s547 = sld [smem:[#allocation4 + $0x39]]
        %v548 = vld [vmem:[%s199 + $0x1] sm:$0xff]
        %v549 = vstv %s546
        %v550 = vmul.f32 %v549, %v548
        %v551 = vadd.f32 %v545, %v550
        %v552 = vld [vmem:[%s348 + $0x1] sm:$0xff]
        %v553 = vstv %s547
        %v554 = vmul.f32 %v553, %v552
        %v555 = vadd.f32 %v551, %v554
        %s556 = sld [smem:[#allocation4 + $0x9]]
        %s557 = sld [smem:[#allocation4 + $0x3a]]
        %v558 = vld [vmem:[%s223 + $0x1] sm:$0xff]
        %v559 = vstv %s556
        %v560 = vmul.f32 %v559, %v558
        %v561 = vadd.f32 %v555, %v560
        %v562 = vld [vmem:[%s371 + $0x1] sm:$0xff]
        %v563 = vstv %s557
        %v564 = vmul.f32 %v563, %v562
        %v565 = vadd.f32 %v561, %v564
        %s566 = sld [smem:[#allocation4 + $0xa]]
        %s567 = sld [smem:[#allocation4 + $0x3b]]
        %v568 = vld [vmem:[%s247 + $0x1] sm:$0xff]
        %v569 = vstv %s566
        %v570 = vmul.f32 %v569, %v568
        %v571 = vadd.f32 %v565, %v570
        %v572 = vld [vmem:[%s394 + $0x1] sm:$0xff]
        %v573 = vstv %s567
        %v574 = vmul.f32 %v573, %v572
        %v575 = vadd.f32 %v571, %v574
        %s576 = sld [smem:[#allocation4 + $0xb]]
        %s577 = sld [smem:[#allocation4 + $0x3c]]
        %v578 = vld [vmem:[%s271 + $0x1] sm:$0xff]
        %v579 = vstv %s576
        %v580 = vmul.f32 %v579, %v578
        %v581 = vadd.f32 %v575, %v580
        %v582 = vld [vmem:[%s417 + $0x1] sm:$0xff]
        %v583 = vstv %s577
        %v584 = vmul.f32 %v583, %v582
        %v585 = vadd.f32 %v581, %v584
        %s586 = sld [smem:[#allocation4 + $0xc]]
        %s587 = sld [smem:[#allocation4 + $0x3d]]
        %v588 = vld [vmem:[%s295 + $0x1] sm:$0xff]
        %v589 = vstv %s586
        %v590 = vmul.f32 %v589, %v588
        %v591 = vadd.f32 %v585, %v590
        %v592 = vld [vmem:[%s440 + $0x1] sm:$0xff]
        %v593 = vstv %s587
        %v594 = vmul.f32 %v593, %v592
        %v595 = vadd.f32 %v591, %v594
        %s596 = sld [smem:[#allocation4 + $0xd]]
        %s597 = sld [smem:[#allocation4 + $0x3e]]
        %v598 = vld [vmem:[%s319 + $0x1] sm:$0xff]
        %v599 = vstv %s596
        %v600 = vmul.f32 %v599, %v598
        %v601 = vadd.f32 %v595, %v600
        %v602 = vld [vmem:[%s463 + $0x1] sm:$0xff]
        %v603 = vstv %s597
        %v604 = vmul.f32 %v603, %v602
        %v605 = vadd.f32 %v601, %v604
        %s606 = sld [smem:[#allocation4 + $0xe]]
        %s607 = sld [smem:[#allocation4 + $0x3f]]
        %v608 = vld [vmem:[#allocation2 + $0x2] sm:$0xff]
        %v609 = vstv %s606
        %v610 = vmul.f32 %v609, %v608
        %v611 = vadd.f32 %v605, %v610
        %v612 = vld [vmem:[%s325 + $0x2] sm:$0xff]
        %v613 = vstv %s607
        %v614 = vmul.f32 %v613, %v612
        %v615 = vadd.f32 %v611, %v614
        %s616 = sld [smem:[#allocation4 + $0xf]]
        %s617 = sld [smem:[#allocation4 + $0x40]]
        %v618 = vld [vmem:[%s199 + $0x2] sm:$0xff]
        %v619 = vstv %s616
        %v620 = vmul.f32 %v619, %v618
        %v621 = vadd.f32 %v615, %v620
        %v622 = vld [vmem:[%s348 + $0x2] sm:$0xff]
        %v623 = vstv %s617
        %v624 = vmul.f32 %v623, %v622
        %v625 = vadd.f32 %v621, %v624
        %s626 = sld [smem:[#allocation4 + $0x10]]
        %s627 = sld [smem:[#allocation4 + $0x41]]
        %v628 = vld [vmem:[%s223 + $0x2] sm:$0xff]
        %v629 = vstv %s626
        %v630 = vmul.f32 %v629, %v628
        %v631 = vadd.f32 %v625, %v630
        %v632 = vld [vmem:[%s371 + $0x2] sm:$0xff]
        %v633 = vstv %s627
        %v634 = vmul.f32 %v633, %v632
        %v635 = vadd.f32 %v631, %v634
        %s636 = sld [smem:[#allocation4 + $0x11]]
        %s637 = sld [smem:[#allocation4 + $0x42]]
        %v638 = vld [vmem:[%s247 + $0x2] sm:$0xff]
        %v639 = vstv %s636
        %v640 = vmul.f32 %v639, %v638
        %v641 = vadd.f32 %v635, %v640
        %v642 = vld [vmem:[%s394 + $0x2] sm:$0xff]
        %v643 = vstv %s637
        %v644 = vmul.f32 %v643, %v642
        %v645 = vadd.f32 %v641, %v644
        %s646 = sld [smem:[#allocation4 + $0x12]]
        %s647 = sld [smem:[#allocation4 + $0x43]]
        %v648 = vld [vmem:[%s271 + $0x2] sm:$0xff]
        %v649 = vstv %s646
        %v650 = vmul.f32 %v649, %v648
        %v651 = vadd.f32 %v645, %v650
        %v652 = vld [vmem:[%s417 + $0x2] sm:$0xff]
        %v653 = vstv %s647
        %v654 = vmul.f32 %v653, %v652
        %v655 = vadd.f32 %v651, %v654
        %s656 = sld [smem:[#allocation4 + $0x13]]
        %s657 = sld [smem:[#allocation4 + $0x44]]
        %v658 = vld [vmem:[%s295 + $0x2] sm:$0xff]
        %v659 = vstv %s656
        %v660 = vmul.f32 %v659, %v658
        %v661 = vadd.f32 %v655, %v660
        %v662 = vld [vmem:[%s440 + $0x2] sm:$0xff]
        %v663 = vstv %s657
        %v664 = vmul.f32 %v663, %v662
        %v665 = vadd.f32 %v661, %v664
        %s666 = sld [smem:[#allocation4 + $0x14]]
        %s667 = sld [smem:[#allocation4 + $0x45]]
        %v668 = vld [vmem:[%s319 + $0x2] sm:$0xff]
        %v669 = vstv %s666
        %v670 = vmul.f32 %v669, %v668
        %v671 = vadd.f32 %v665, %v670
        %v672 = vld [vmem:[%s463 + $0x2] sm:$0xff]
        %v673 = vstv %s667
        %v674 = vmul.f32 %v673, %v672
        %v675 = vadd.f32 %v671, %v674
        %s676 = sld [smem:[#allocation4 + $0x15]]
        %s677 = sld [smem:[#allocation4 + $0x46]]
        %v678 = vld [vmem:[#allocation2 + $0x3] sm:$0xff]
        %v679 = vstv %s676
        %v680 = vmul.f32 %v679, %v678
        %v681 = vadd.f32 %v675, %v680
        %v682 = vld [vmem:[%s325 + $0x3] sm:$0xff]
        %v683 = vstv %s677
        %v684 = vmul.f32 %v683, %v682
        %v685 = vadd.f32 %v681, %v684
        %s686 = sld [smem:[#allocation4 + $0x16]]
        %s687 = sld [smem:[#allocation4 + $0x47]]
        %v688 = vld [vmem:[%s199 + $0x3] sm:$0xff]
        %v689 = vstv %s686
        %v690 = vmul.f32 %v689, %v688
        %v691 = vadd.f32 %v685, %v690
        %v692 = vld [vmem:[%s348 + $0x3] sm:$0xff]
        %v693 = vstv %s687
        %v694 = vmul.f32 %v693, %v692
        %v695 = vadd.f32 %v691, %v694
        %s696 = sld [smem:[#allocation4 + $0x17]]
        %s697 = sld [smem:[#allocation4 + $0x48]]
        %v698 = vld [vmem:[%s223 + $0x3] sm:$0xff]
        %v699 = vstv %s696
        %v700 = vmul.f32 %v699, %v698
        %v701 = vadd.f32 %v695, %v700
        %v702 = vld [vmem:[%s371 + $0x3] sm:$0xff]
        %v703 = vstv %s697
        %v704 = vmul.f32 %v703, %v702
        %v705 = vadd.f32 %v701, %v704
        %s706 = sld [smem:[#allocation4 + $0x18]]
        %s707 = sld [smem:[#allocation4 + $0x49]]
        %v708 = vld [vmem:[%s247 + $0x3] sm:$0xff]
        %v709 = vstv %s706
        %v710 = vmul.f32 %v709, %v708
        %v711 = vadd.f32 %v705, %v710
        %v712 = vld [vmem:[%s394 + $0x3] sm:$0xff]
        %v713 = vstv %s707
        %v714 = vmul.f32 %v713, %v712
        %v715 = vadd.f32 %v711, %v714
        %s716 = sld [smem:[#allocation4 + $0x19]]
        %s717 = sld [smem:[#allocation4 + $0x4a]]
        %v718 = vld [vmem:[%s271 + $0x3] sm:$0xff]
        %v719 = vstv %s716
        %v720 = vmul.f32 %v719, %v718
        %v721 = vadd.f32 %v715, %v720
        %v722 = vld [vmem:[%s417 + $0x3] sm:$0xff]
        %v723 = vstv %s717
        %v724 = vmul.f32 %v723, %v722
        %v725 = vadd.f32 %v721, %v724
        %s726 = sld [smem:[#allocation4 + $0x1a]]
        %s727 = sld [smem:[#allocation4 + $0x4b]]
        %v728 = vld [vmem:[%s295 + $0x3] sm:$0xff]
        %v729 = vstv %s726
        %v730 = vmul.f32 %v729, %v728
        %v731 = vadd.f32 %v725, %v730
        %v732 = vld [vmem:[%s440 + $0x3] sm:$0xff]
        %v733 = vstv %s727
        %v734 = vmul.f32 %v733, %v732
        %v735 = vadd.f32 %v731, %v734
        %s736 = sld [smem:[#allocation4 + $0x1b]]
        %s737 = sld [smem:[#allocation4 + $0x4c]]
        %v738 = vld [vmem:[%s319 + $0x3] sm:$0xff]
        %v739 = vstv %s736
        %v740 = vmul.f32 %v739, %v738
        %v741 = vadd.f32 %v735, %v740
        %v742 = vld [vmem:[%s463 + $0x3] sm:$0xff]
        %v743 = vstv %s737
        %v744 = vmul.f32 %v743, %v742
        %v745 = vadd.f32 %v741, %v744
        %s746 = sld [smem:[#allocation4 + $0x1c]]
        %s747 = sld [smem:[#allocation4 + $0x4d]]
        %v748 = vld [vmem:[#allocation2 + $0x4] sm:$0xff]
        %v749 = vstv %s746
        %v750 = vmul.f32 %v749, %v748
        %v751 = vadd.f32 %v745, %v750
        %v752 = vld [vmem:[%s325 + $0x4] sm:$0xff]
        %v753 = vstv %s747
        %v754 = vmul.f32 %v753, %v752
        %v755 = vadd.f32 %v751, %v754
        %s756 = sld [smem:[#allocation4 + $0x1d]]
        %s757 = sld [smem:[#allocation4 + $0x4e]]
        %v758 = vld [vmem:[%s199 + $0x4] sm:$0xff]
        %v759 = vstv %s756
        %v760 = vmul.f32 %v759, %v758
        %v761 = vadd.f32 %v755, %v760
        %v762 = vld [vmem:[%s348 + $0x4] sm:$0xff]
        %v763 = vstv %s757
        %v764 = vmul.f32 %v763, %v762
        %v765 = vadd.f32 %v761, %v764
        %s766 = sld [smem:[#allocation4 + $0x1e]]
        %s767 = sld [smem:[#allocation4 + $0x4f]]
        %v768 = vld [vmem:[%s223 + $0x4] sm:$0xff]
        %v769 = vstv %s766
        %v770 = vmul.f32 %v769, %v768
        %v771 = vadd.f32 %v765, %v770
        %v772 = vld [vmem:[%s371 + $0x4] sm:$0xff]
        %v773 = vstv %s767
        %v774 = vmul.f32 %v773, %v772
        %v775 = vadd.f32 %v771, %v774
        %s776 = sld [smem:[#allocation4 + $0x1f]]
        %s777 = sld [smem:[#allocation4 + $0x50]]
        %v778 = vld [vmem:[%s247 + $0x4] sm:$0xff]
        %v779 = vstv %s776
        %v780 = vmul.f32 %v779, %v778
        %v781 = vadd.f32 %v775, %v780
        %v782 = vld [vmem:[%s394 + $0x4] sm:$0xff]
        %v783 = vstv %s777
        %v784 = vmul.f32 %v783, %v782
        %v785 = vadd.f32 %v781, %v784
        %s786 = sld [smem:[#allocation4 + $0x20]]
        %s787 = sld [smem:[#allocation4 + $0x51]]
        %v788 = vld [vmem:[%s271 + $0x4] sm:$0xff]
        %v789 = vstv %s786
        %v790 = vmul.f32 %v789, %v788
        %v791 = vadd.f32 %v785, %v790
        %v792 = vld [vmem:[%s417 + $0x4] sm:$0xff]
        %v793 = vstv %s787
        %v794 = vmul.f32 %v793, %v792
        %v795 = vadd.f32 %v791, %v794
        %s796 = sld [smem:[#allocation4 + $0x21]]
        %s797 = sld [smem:[#allocation4 + $0x52]]
        %v798 = vld [vmem:[%s295 + $0x4] sm:$0xff]
        %v799 = vstv %s796
        %v800 = vmul.f32 %v799, %v798
        %v801 = vadd.f32 %v795, %v800
        %v802 = vld [vmem:[%s440 + $0x4] sm:$0xff]
        %v803 = vstv %s797
        %v804 = vmul.f32 %v803, %v802
        %v805 = vadd.f32 %v801, %v804
        %s806 = sld [smem:[#allocation4 + $0x22]]
        %s807 = sld [smem:[#allocation4 + $0x53]]
        %v808 = vld [vmem:[%s319 + $0x4] sm:$0xff]
        %v809 = vstv %s806
        %v810 = vmul.f32 %v809, %v808
        %v811 = vadd.f32 %v805, %v810
        %v812 = vld [vmem:[%s463 + $0x4] sm:$0xff]
        %v813 = vstv %s807
        %v814 = vmul.f32 %v813, %v812
        %v815 = vadd.f32 %v811, %v814
        %s816 = sld [smem:[#allocation4 + $0x23]]
        %s817 = sld [smem:[#allocation4 + $0x54]]
        %v818 = vld [vmem:[#allocation2 + $0x5] sm:$0xff]
        %v819 = vstv %s816
        %v820 = vmul.f32 %v819, %v818
        %v821 = vadd.f32 %v815, %v820
        %v822 = vld [vmem:[%s325 + $0x5] sm:$0xff]
        %v823 = vstv %s817
        %v824 = vmul.f32 %v823, %v822
        %v825 = vadd.f32 %v821, %v824
        %s826 = sld [smem:[#allocation4 + $0x24]]
        %s827 = sld [smem:[#allocation4 + $0x55]]
        %v828 = vld [vmem:[%s199 + $0x5] sm:$0xff]
        %v829 = vstv %s826
        %v830 = vmul.f32 %v829, %v828
        %v831 = vadd.f32 %v825, %v830
        %v832 = vld [vmem:[%s348 + $0x5] sm:$0xff]
        %v833 = vstv %s827
        %v834 = vmul.f32 %v833, %v832
        %v835 = vadd.f32 %v831, %v834
        %s836 = sld [smem:[#allocation4 + $0x25]]
        %s837 = sld [smem:[#allocation4 + $0x56]]
        %v838 = vld [vmem:[%s223 + $0x5] sm:$0xff]
        %v839 = vstv %s836
        %v840 = vmul.f32 %v839, %v838
        %v841 = vadd.f32 %v835, %v840
        %v842 = vld [vmem:[%s371 + $0x5] sm:$0xff]
        %v843 = vstv %s837
        %v844 = vmul.f32 %v843, %v842
        %v845 = vadd.f32 %v841, %v844
        %s846 = sld [smem:[#allocation4 + $0x26]]
        %s847 = sld [smem:[#allocation4 + $0x57]]
        %v848 = vld [vmem:[%s247 + $0x5] sm:$0xff]
        %v849 = vstv %s846
        %v850 = vmul.f32 %v849, %v848
        %v851 = vadd.f32 %v845, %v850
        %v852 = vld [vmem:[%s394 + $0x5] sm:$0xff]
        %v853 = vstv %s847
        %v854 = vmul.f32 %v853, %v852
        %v855 = vadd.f32 %v851, %v854
        %s856 = sld [smem:[#allocation4 + $0x27]]
        %s857 = sld [smem:[#allocation4 + $0x58]]
        %v858 = vld [vmem:[%s271 + $0x5] sm:$0xff]
        %v859 = vstv %s856
        %v860 = vmul.f32 %v859, %v858
        %v861 = vadd.f32 %v855, %v860
        %v862 = vld [vmem:[%s417 + $0x5] sm:$0xff]
        %v863 = vstv %s857
        %v864 = vmul.f32 %v863, %v862
        %v865 = vadd.f32 %v861, %v864
        %s866 = sld [smem:[#allocation4 + $0x28]]
        %s867 = sld [smem:[#allocation4 + $0x59]]
        %v868 = vld [vmem:[%s295 + $0x5] sm:$0xff]
        %v869 = vstv %s866
        %v870 = vmul.f32 %v869, %v868
        %v871 = vadd.f32 %v865, %v870
        %v872 = vld [vmem:[%s440 + $0x5] sm:$0xff]
        %v873 = vstv %s867
        %v874 = vmul.f32 %v873, %v872
        %v875 = vadd.f32 %v871, %v874
        %s876 = sld [smem:[#allocation4 + $0x29]]
        %s877 = sld [smem:[#allocation4 + $0x5a]]
        %v878 = vld [vmem:[%s319 + $0x5] sm:$0xff]
        %v879 = vstv %s876
        %v880 = vmul.f32 %v879, %v878
        %v881 = vadd.f32 %v875, %v880
        %v882 = vld [vmem:[%s463 + $0x5] sm:$0xff]
        %v883 = vstv %s877
        %v884 = vmul.f32 %v883, %v882
        %v885 = vadd.f32 %v881, %v884
        %s886 = sld [smem:[#allocation4 + $0x2a]]
        %s887 = sld [smem:[#allocation4 + $0x5b]]
        %v888 = vld [vmem:[#allocation2 + $0x6] sm:$0xff]
        %v889 = vstv %s886
        %v890 = vmul.f32 %v889, %v888
        %v891 = vadd.f32 %v885, %v890
        %v892 = vld [vmem:[%s325 + $0x6] sm:$0xff]
        %v893 = vstv %s887
        %v894 = vmul.f32 %v893, %v892
        %v895 = vadd.f32 %v891, %v894
        %s896 = sld [smem:[#allocation4 + $0x2b]]
        %s897 = sld [smem:[#allocation4 + $0x5c]]
        %v898 = vld [vmem:[%s199 + $0x6] sm:$0xff]
        %v899 = vstv %s896
        %v900 = vmul.f32 %v899, %v898
        %v901 = vadd.f32 %v895, %v900
        %v902 = vld [vmem:[%s348 + $0x6] sm:$0xff]
        %v903 = vstv %s897
        %v904 = vmul.f32 %v903, %v902
        %v905 = vadd.f32 %v901, %v904
        %s906 = sld [smem:[#allocation4 + $0x2c]]
        %s907 = sld [smem:[#allocation4 + $0x5d]]
        %v908 = vld [vmem:[%s223 + $0x6] sm:$0xff]
        %v909 = vstv %s906
        %v910 = vmul.f32 %v909, %v908
        %v911 = vadd.f32 %v905, %v910
        %v912 = vld [vmem:[%s371 + $0x6] sm:$0xff]
        %v913 = vstv %s907
        %v914 = vmul.f32 %v913, %v912
        %v915 = vadd.f32 %v911, %v914
        %s916 = sld [smem:[#allocation4 + $0x2d]]
        %s917 = sld [smem:[#allocation4 + $0x5e]]
        %v918 = vld [vmem:[%s247 + $0x6] sm:$0xff]
        %v919 = vstv %s916
        %v920 = vmul.f32 %v919, %v918
        %v921 = vadd.f32 %v915, %v920
        %v922 = vld [vmem:[%s394 + $0x6] sm:$0xff]
        %v923 = vstv %s917
        %v924 = vmul.f32 %v923, %v922
        %v925 = vadd.f32 %v921, %v924
        %s926 = sld [smem:[#allocation4 + $0x2e]]
        %s927 = sld [smem:[#allocation4 + $0x5f]]
        %v928 = vld [vmem:[%s271 + $0x6] sm:$0xff]
        %v929 = vstv %s926
        %v930 = vmul.f32 %v929, %v928
        %v931 = vadd.f32 %v925, %v930
        %v932 = vld [vmem:[%s417 + $0x6] sm:$0xff]
        %v933 = vstv %s927
        %v934 = vmul.f32 %v933, %v932
        %v935 = vadd.f32 %v931, %v934
        %s936 = sld [smem:[#allocation4 + $0x2f]]
        %s937 = sld [smem:[#allocation4 + $0x60]]
        %v938 = vld [vmem:[%s295 + $0x6] sm:$0xff]
        %v939 = vstv %s936
        %v940 = vmul.f32 %v939, %v938
        %v941 = vadd.f32 %v935, %v940
        %v942 = vld [vmem:[%s440 + $0x6] sm:$0xff]
        %v943 = vstv %s937
        %v944 = vmul.f32 %v943, %v942
        %v945 = vadd.f32 %v941, %v944
        %s946 = sld [smem:[#allocation4 + $0x30]]
        %s947 = sld [smem:[#allocation4 + $0x61]]
        %v948 = vld [vmem:[%s319 + $0x6] sm:$0xff]
        %v949 = vstv %s946
        %v950 = vmul.f32 %v949, %v948
        %v951 = vadd.f32 %v945, %v950
        %v952 = vld [vmem:[%s463 + $0x6] sm:$0xff]
        %v953 = vstv %s947
        %v954 = vmul.f32 %v953, %v952
        %v955 = vadd.f32 %v951, %v954
        %v956 = vsub.f32 0.0, %v955
        %v957 = vmul.f32 %v956, 1.442695
        %v958 = vpow.pop %v957
        %v959 = vadd.f32 %v958, 1.0
        %v960 = vrcp.pop %v959
        %961 = vst [vmem:[%s173] sm:$0xff] %v960
        %s962 = sand.u32 %s72, 1
        %s963 = scalar_lea.sflag [#allocation7], %s962
        %s964 = sand.u32 %s72, 1
        %s965 = smul.addr %s964, 8
        %s966 = scalar_lea.vmem [#allocation6], %s965
        // Predicated region
        $region48: #{tpu_custom_call.1} parent=42 // pred_check
          %p967 = pneg %p82
        $region49: #{tpu_custom_call.1} parent=42 // pred_check_branch
          %969 = sbr.rel (%p967) target = $region51
        $region50: #{tpu_custom_call.1} parent=42 // pred_region
          %s971 = ssub.s32 128, 128
          %972 = vsyncadd %s963, %s971
          %s973 = smul.addr %s26, 2
          %s974 = sadd.s32 %s27, %s973
          %s975 = smul.addr %s974, 128
          %s976 = scalar_lea.hbm %s2, %s975
          %s978 = sshll.u32 %s966, 4
          %s979 = int_to_ptr.vmem [resolvable:$true] %s978
          %981 = dma.vmem_to_hbm [thread:$0]  %s979, 128, %s976, %s963
        $region51: #{tpu_custom_call.1} parent=42 // pred_fallthru
          _
      $region43: #{tpu_custom_call.1} parent=5 // pred_fallthru
        _
      %p982 = scmp.le.s32.totalorder 2, %s17
      // Predicated region
      $region52: #{tpu_custom_call.1} parent=5 // pred_check
        %p983 = pneg %p982
      $region53: #{tpu_custom_call.1} parent=5 // pred_check_branch
        %985 = sbr.rel (%p983) target = $region55
      $region54: #{tpu_custom_call.1} parent=5 // pred_region
        %s986 = ssub.s32 %s17, 2
        // Predicated region
        $region56: #{tpu_custom_call.1} parent=54 // pred_check
          %p987 = pneg %p88
        $region57: #{tpu_custom_call.1} parent=54 // pred_check_branch
          %989 = sbr.rel (%p987) target = $region59
        $region58: #{tpu_custom_call.1} parent=54 // pred_region
          %s990 = sand.u32 %s73, 1
          %s991 = scalar_lea.sflag [#allocation7], %s990
          %s992 = sand.u32 %s73, 1
          %s993 = smul.addr %s992, 8
          %s994 = scalar_lea.vmem [#allocation6], %s993
          %995 = dma.done %s991, 128
        $region59: #{tpu_custom_call.1} parent=54 // pred_fallthru
          _
      $region55: #{tpu_custom_call.1} parent=5 // pred_fallthru
        _
    $region6: #{tpu_custom_call.1} parent=1 // loop_footer
      %s21 = sadd.s32 1, %s17
    $region7: #{tpu_custom_call.1} parent=1 // loop_footer_branch
      %16 = sbr.rel target = $region3
    $region8: #{tpu_custom_call.1} parent=1 // loop_exit
      _
    %996 = vsyncpa [#allocation7], 1
    %s997 = scalar_lea.sflag [#allocation7], 1
    %998 = vsyncpa %s997, 1

</llo_original>
